<compile_context>
chip_gen: v7x
topology: tpu7x:2x2x1
jax: 0.10.0
libtpu: 0.0.40
codegen_flags: <defaults>
</compile_context>

<pallas_src>
import functools

import numpy as np
import jax
import jax.numpy as jnp
from jax import lax
from jax.experimental import pallas as pl
from jax.experimental.pallas import tpu as pltpu

# ----- synthetic config (small, consistent with the module) -----
B = 2                 # batch
C = 8                 # attention_dim (divisible by 4 for GroupNorm(4, C))
N = 16                # segment_num
NN = N * N
G = 4                 # GroupNorm groups
POOLING_COUNTS = [7, 4]
EPS = 1e-5
NEG = -1e30


def build_mask2d(pooling_counts, n):
    """Replicates SparseMaxPool.__init__ mask2d construction."""
    mask = np.zeros((n, n), dtype=np.float32)
    mask[np.arange(n), np.arange(n)] = 1.0
    stride, offset = 1, 0
    for c in pooling_counts:
        for _ in range(c):
            offset += stride
            i = np.arange(0, n - offset, stride)
            j = np.arange(offset, n, stride)
            mask[i, j] = 1.0
        stride *= 2
    return mask


def tan_decoder_kernel(fea_ref, rep_ref, w1_ref, wp2_ref, cm_ref, out_ref, *,
                       batch, c, n, logn):
    """Single program.  fea_ref: [C, B*N], rep_ref: [B*N, B*NN] replication
    matrix, w1_ref: [9, C, C] bf16 conv taps, wp2_ref: [C, 128] packed params,
    cm_ref: [logn+10, C, B*NN] pre-broadcast constant masks."""
    nn = n * n
    bnn = batch * nn

    wp2 = wp2_ref[...]                                     # [C, 128]

    # ---- 0. f0[c, b*NN + i*N + j] = fea[b, c, j] via one MXU dot --------------
    f0 = jnp.dot(fea_ref[...], rep_ref[...],
                 preferred_element_type=jnp.float32)       # [C, B*NN]

    # ---- 1. SparseMaxPool: exact span max via doubling lane-rolls -------------
    # invariant after step t: fmax[:, b, i, j] = max x[k], k in [max(i, j-2^t+1), j]
    fmax = f0
    for t in range(logn):
        s = 1 << t
        shifted = pltpu.roll(fmax, shift=s, axis=1)        # shifted[:, p] = fmax[:, p-s]
        fmax = jnp.maximum(fmax, shifted + cm_ref[t])      # additive 0 / -1e30 mask
    mask2d_full = cm_ref[logn + 9]                         # [C, B*NN], 0/1, tiled per batch
    fmap = fmax * mask2d_full                              # zero outside sparse mask

    # ---- 2. Conv2d(C, C, 3, pad=1, no bias): 9 masked rolls, 9 bf16 MXU dots --
    acc = None
    for u in range(3):
        for v in range(3):
            k = u * 3 + v
            d = (u - 1) * n + (v - 1)                      # flat lane offset of tap
            sh = fmap if d == 0 else pltpu.roll(fmap, shift=(-d) % bnn, axis=1)
            tap = (sh * cm_ref[logn + k]).astype(jnp.bfloat16)   # zero OOB neighbors
            part = jnp.dot(w1_ref[k], tap, preferred_element_type=jnp.float32)
            acc = part if acc is None else acc + part      # [C, B*NN] f32

    # ---- 3. GroupNorm(G, C): two-pass stats, computed per batch element -------
    avg = wp2[:, :c]                                       # [C, C] in-group / (CG*NN)
    csum = jnp.concatenate(
        [jnp.sum(acc[:, bi * nn:(bi + 1) * nn], axis=1, keepdims=True)
         for bi in range(batch)], axis=1)                  # [C, B]
    mu = jnp.dot(avg, csum, preferred_element_type=jnp.float32)       # [C, B]
    cens = [acc[:, bi * nn:(bi + 1) * nn] - mu[:, bi:bi + 1]
            for bi in range(batch)]                        # B x [C, NN]
    ssum = jnp.concatenate(
        [jnp.sum(cb * cb, axis=1, keepdims=True) for cb in cens], axis=1)
    var = jnp.dot(avg, ssum, preferred_element_type=jnp.float32)      # [C, B]
    rstd = lax.rsqrt(var + EPS)

    gamma = wp2[:, c:c + 1]                                # [C, 1]
    beta = wp2[:, c + 1:c + 2]
    w2 = wp2[:, c + 2:c + 3]
    b2 = wp2[0:1, c + 3:c + 4]                             # [1, 1]
    m2d_row = mask2d_full[0:1, :nn]                        # [1, NN], same every batch

    # ---- 4-6. affine + ReLU + Conv2d(C,1,1) + bias + sigmoid * mask2d ----------
    outs = []
    for bi in range(batch):
        h = cens[bi] * rstd[:, bi:bi + 1] * gamma + beta
        h = jnp.maximum(h, 0.0)                            # ReLU
        o = jnp.sum(h * w2, axis=0, keepdims=True) + b2    # [1, NN]
        outs.append(jax.nn.sigmoid(o) * m2d_row)
    out_ref[...] = jnp.concatenate(outs, axis=1)           # [1, B*NN], lane-dense


def _build_constants(params, mask2d, batch, c, n):
    """Grid-invariant device constants (reusable across calls)."""
    nn = n * n
    bnn = batch * nn
    logn = (n - 1).bit_length()            # doubling steps so 2^logn >= n
    cg = c // G

    ii = np.arange(nn) // n
    jj = np.arange(nn) % n

    # f0 replication matrix: rep[b*N + j, b*NN + i*N + j] = 1 for all i
    rep = np.zeros((batch * n, bnn), np.float32)
    for bi in range(batch):
        rep[bi * n + jj, bi * nn + np.arange(nn)] = 1.0

    # conv3x3 weight [O, I, 3, 3] -> 9 taps of [C_out, C_in], bf16
    w1_taps = jnp.transpose(params["w1"], (2, 3, 0, 1)).reshape(9, c, c)
    w1_taps = w1_taps.astype(jnp.bfloat16)

    # packed small params, lane-padded to 128:
    # cols [0, C): group averaging matrix; C: gamma; C+1: beta; C+2: conv1x1 w;
    # C+3: conv1x1 bias (broadcast); rest zero.
    avg = np.zeros((c, c), np.float32)
    for ch in range(c):
        g = ch // cg
        avg[ch, g * cg:(g + 1) * cg] = 1.0 / (cg * nn)
    wp2 = jnp.concatenate([
        jnp.asarray(avg),
        params["gamma"].reshape(c, 1).astype(jnp.float32),
        params["beta"].reshape(c, 1).astype(jnp.float32),
        params["w2"].reshape(c, 1).astype(jnp.float32),
        jnp.broadcast_to(params["b2"].reshape(1, 1).astype(jnp.float32), (c, 1)),
        jnp.zeros((c, 128 - c - 4), jnp.float32),
    ], axis=1)

    # constant masks pre-broadcast to [C, B*NN]:
    #   rows [0, logn): pooling-step validity, ADDITIVE 0 / -1e30
    #   rows [logn, logn+9): 3x3 conv boundary validity, multiplicative 0/1
    #   row  logn+9: sparse mask2d, multiplicative 0/1
    nconst = logn + 10
    consts = np.zeros((nconst, c, bnn), np.float32)
    pool = np.where((jj[None, :] - ii[None, :]) >= (1 << np.arange(logn))[:, None],
                    0.0, NEG).astype(np.float32)                       # [logn, NN]
    conv = np.zeros((9, nn), np.float32)
    for u in range(3):
        for v in range(3):
            du, dv = u - 1, v - 1
            conv[u * 3 + v] = ((ii + du >= 0) & (ii + du < n) &
                               (jj + dv >= 0) & (jj + dv < n)).astype(np.float32)
    m2d = np.asarray(mask2d, np.float32).reshape(nn)
    for bi in range(batch):
        sl = slice(bi * nn, (bi + 1) * nn)
        consts[:logn, :, sl] = pool[:, None, :]
        consts[logn:logn + 9, :, sl] = conv[:, None, :]
        consts[logn + 9, :, sl] = m2d[None, :]

    return jnp.asarray(rep), w1_taps, wp2, jnp.asarray(consts), logn


def tan_decoder_pallas(fea, params, mask2d):
    """fea: [B, C, N] float32.  Returns sigmoid(decoder(to_2dmap(fea))) * mask2d,
    shape [B, 1, N, N] (the eval-mode score map of TANDecoder)."""
    batch, c, n = fea.shape
    bnn = batch * n * n
    rep, w1_taps, wp2, consts, logn = _build_constants(params, mask2d, batch, c, n)

    # channels in sublanes, (batch, time) in lanes: [C, B*N]
    fea_flat = jnp.transpose(fea, (1, 0, 2)).reshape(c, batch * n).astype(jnp.float32)

    kernel = functools.partial(tan_decoder_kernel, batch=batch, c=c, n=n, logn=logn)
    vmem = pl.BlockSpec(memory_space=pltpu.MemorySpace.VMEM)
    out = pl.pallas_call(
        kernel,
        out_shape=jax.ShapeDtypeStruct((1, bnn), jnp.float32),
        in_specs=[vmem] * 5,
        out_specs=vmem,
    )(fea_flat, rep, w1_taps, wp2, consts)
    return out.reshape(batch, 1, n, n)


def reference_forward(fea, params, mask2d):
    """Plain-JAX reference of the same forward path (for verification)."""
    b, c, n = fea.shape
    idx = jnp.arange(n)
    sel = (idx[None, None, :] >= idx[:, None, None]) & \
          (idx[None, None, :] <= idx[None, :, None])                  # [Ni, Nj, Nk]
    vals = jnp.where(sel[None, None], fea[:, :, None, None, :], NEG)
    m2d = jnp.max(vals, axis=-1)                                      # [B, C, N, N]
    fmap = jnp.where(mask2d[None, None] > 0, m2d, 0.0)
    h = lax.conv_general_dilated(fmap, params["w1"], (1, 1), "SAME",
                                 dimension_numbers=("NCHW", "OIHW", "NCHW"),
                                 precision=lax.Precision.HIGHEST)
    hg = h.reshape(b, G, (c // G) * n * n)
    mu = hg.mean(-1, keepdims=True)
    var = ((hg - mu) ** 2).mean(-1, keepdims=True)
    hg = (hg - mu) / jnp.sqrt(var + EPS)
    h = hg.reshape(b, c, n, n)
    h = h * params["gamma"].reshape(1, c, 1, 1) + params["beta"].reshape(1, c, 1, 1)
    h = jnp.maximum(h, 0.0)
    o = jnp.einsum("oc,bchw->bohw", params["w2"].reshape(1, c), h,
                   precision=lax.Precision.HIGHEST) + params["b2"].reshape(1, 1, 1, 1)
    return jax.nn.sigmoid(o) * mask2d[None, None]


if __name__ == "__main__":
    key = jax.random.PRNGKey(0)
    k1, k2, k3, k4, k5, k6 = jax.random.split(key, 6)
    fea = jax.random.normal(k1, (B, C, N), jnp.float32)
    params = {
        "w1": 0.1 * jax.random.normal(k2, (C, C, 3, 3), jnp.float32),
        "gamma": 1.0 + 0.1 * jax.random.normal(k3, (C,), jnp.float32),
        "beta": 0.1 * jax.random.normal(k4, (C,), jnp.float32),
        "w2": 0.3 * jax.random.normal(k5, (1, C, 1, 1), jnp.float32),
        "b2": 0.05 * jax.random.normal(k6, (1,), jnp.float32),
    }
    mask2d = jnp.asarray(build_mask2d(POOLING_COUNTS, N))

    out = jax.block_until_ready(tan_decoder_pallas(fea, params, mask2d))
    ref = jax.block_until_ready(reference_forward(fea, params, mask2d))

    assert out.shape == (B, 1, N, N), out.shape
    # loose tolerance: the 3x3 conv matmul runs in bf16 on the MXU (f32 accum)
    max_err = float(jnp.max(jnp.abs(out - ref)))
    assert max_err < 2e-2, f"max abs err {max_err}"
    print("KERNEL_OK")
</pallas_src>

<mosaic_0001>
module attributes {stable_mosaic.version = 11 : i64} {
  func.func @tan_decoder_kernel(%arg0: memref<8x32xf32, #tpu.memory_space<vmem>>, %arg1: memref<32x512xf32, #tpu.memory_space<vmem>>, %arg2: memref<9x8x8xbf16, #tpu.memory_space<vmem>>, %arg3: memref<8x128xf32, #tpu.memory_space<vmem>>, %arg4: memref<14x8x512xf32, #tpu.memory_space<vmem>>, %arg5: memref<1x512xf32, #tpu.memory_space<vmem>>) attributes {dimension_semantics = [], scalar_prefetch = 0 : i64, scratch_operands = 0 : i64, tpu.core_type = #tpu.core_type<tc>} {
    %c0 = arith.constant 0 : index
    %c0_0 = arith.constant 0 : index
    %0 = vector.load %arg3[%c0, %c0_0] : memref<8x128xf32, #tpu.memory_space<vmem>>, vector<8x128xf32>
    %c0_1 = arith.constant 0 : index
    %c0_2 = arith.constant 0 : index
    %1 = vector.load %arg0[%c0_1, %c0_2] : memref<8x32xf32, #tpu.memory_space<vmem>>, vector<8x32xf32>
    %c0_3 = arith.constant 0 : index
    %c0_4 = arith.constant 0 : index
    %2 = vector.load %arg1[%c0_3, %c0_4] : memref<32x512xf32, #tpu.memory_space<vmem>>, vector<32x512xf32>
    %cst = arith.constant dense<0.000000e+00> : vector<8x512xf32>
    %3 = tpu.matmul %1, %2, %cst {dimension_numbers = #tpu.dot_dimension_numbers<[1], [0], [0], [1], [0, 0, 1, 1], [], []>} : vector<8x32xf32>, vector<32x512xf32>, vector<8x512xf32> -> vector<8x512xf32>
    %c1_i32 = arith.constant 1 : i32
    %4 = tpu.dynamic_rotate %3 by %c1_i32 dim 1 : vector<8x512xf32>, i32 -> vector<8x512xf32>
    %c0_5 = arith.constant 0 : index
    %c0_6 = arith.constant 0 : index
    %c0_7 = arith.constant 0 : index
    %5 = vector.load %arg4[%c0_5, %c0_6, %c0_7] : memref<14x8x512xf32, #tpu.memory_space<vmem>>, vector<1x8x512xf32>
    %6 = vector.shape_cast %5 : vector<1x8x512xf32> to vector<8x512xf32>
    %7 = arith.addf %4, %6 : vector<8x512xf32>
    %8 = arith.maximumf %3, %7 : vector<8x512xf32>
    %c2_i32 = arith.constant 2 : i32
    %9 = tpu.dynamic_rotate %8 by %c2_i32 dim 1 : vector<8x512xf32>, i32 -> vector<8x512xf32>
    %c1 = arith.constant 1 : index
    %c0_8 = arith.constant 0 : index
    %c0_9 = arith.constant 0 : index
    %10 = vector.load %arg4[%c1, %c0_8, %c0_9] : memref<14x8x512xf32, #tpu.memory_space<vmem>>, vector<1x8x512xf32>
    %11 = vector.shape_cast %10 : vector<1x8x512xf32> to vector<8x512xf32>
    %12 = arith.addf %9, %11 : vector<8x512xf32>
    %13 = arith.maximumf %8, %12 : vector<8x512xf32>
    %c4_i32 = arith.constant 4 : i32
    %14 = tpu.dynamic_rotate %13 by %c4_i32 dim 1 : vector<8x512xf32>, i32 -> vector<8x512xf32>
    %c2 = arith.constant 2 : index
    %c0_10 = arith.constant 0 : index
    %c0_11 = arith.constant 0 : index
    %15 = vector.load %arg4[%c2, %c0_10, %c0_11] : memref<14x8x512xf32, #tpu.memory_space<vmem>>, vector<1x8x512xf32>
    %16 = vector.shape_cast %15 : vector<1x8x512xf32> to vector<8x512xf32>
    %17 = arith.addf %14, %16 : vector<8x512xf32>
    %18 = arith.maximumf %13, %17 : vector<8x512xf32>
    %c8_i32 = arith.constant 8 : i32
    %19 = tpu.dynamic_rotate %18 by %c8_i32 dim 1 : vector<8x512xf32>, i32 -> vector<8x512xf32>
    %c3 = arith.constant 3 : index
    %c0_12 = arith.constant 0 : index
    %c0_13 = arith.constant 0 : index
    %20 = vector.load %arg4[%c3, %c0_12, %c0_13] : memref<14x8x512xf32, #tpu.memory_space<vmem>>, vector<1x8x512xf32>
    %21 = vector.shape_cast %20 : vector<1x8x512xf32> to vector<8x512xf32>
    %22 = arith.addf %19, %21 : vector<8x512xf32>
    %23 = arith.maximumf %18, %22 : vector<8x512xf32>
    %c13 = arith.constant 13 : index
    %c0_14 = arith.constant 0 : index
    %c0_15 = arith.constant 0 : index
    %24 = vector.load %arg4[%c13, %c0_14, %c0_15] : memref<14x8x512xf32, #tpu.memory_space<vmem>>, vector<1x8x512xf32>
    %25 = vector.shape_cast %24 : vector<1x8x512xf32> to vector<8x512xf32>
    %26 = arith.mulf %23, %25 : vector<8x512xf32>
    %c17_i32 = arith.constant 17 : i32
    %27 = tpu.dynamic_rotate %26 by %c17_i32 dim 1 : vector<8x512xf32>, i32 -> vector<8x512xf32>
    %c4 = arith.constant 4 : index
    %c0_16 = arith.constant 0 : index
    %c0_17 = arith.constant 0 : index
    %28 = vector.load %arg4[%c4, %c0_16, %c0_17] : memref<14x8x512xf32, #tpu.memory_space<vmem>>, vector<1x8x512xf32>
    %29 = vector.shape_cast %28 : vector<1x8x512xf32> to vector<8x512xf32>
    %30 = arith.mulf %27, %29 : vector<8x512xf32>
    %31 = arith.truncf %30 : vector<8x512xf32> to vector<8x512xbf16>
    %c0_18 = arith.constant 0 : index
    %c0_19 = arith.constant 0 : index
    %c0_20 = arith.constant 0 : index
    %32 = vector.load %arg2[%c0_18, %c0_19, %c0_20] : memref<9x8x8xbf16, #tpu.memory_space<vmem>>, vector<1x8x8xbf16>
    %33 = vector.shape_cast %32 : vector<1x8x8xbf16> to vector<8x8xbf16>
    %cst_21 = arith.constant dense<0.000000e+00> : vector<8x512xf32>
    %34 = tpu.matmul %33, %31, %cst_21 {dimension_numbers = #tpu.dot_dimension_numbers<[1], [0], [0], [1], [0, 0, 1, 1], [], []>} : vector<8x8xbf16>, vector<8x512xbf16>, vector<8x512xf32> -> vector<8x512xf32>
    %c16_i32 = arith.constant 16 : i32
    %35 = tpu.dynamic_rotate %26 by %c16_i32 dim 1 : vector<8x512xf32>, i32 -> vector<8x512xf32>
    %c5 = arith.constant 5 : index
    %c0_22 = arith.constant 0 : index
    %c0_23 = arith.constant 0 : index
    %36 = vector.load %arg4[%c5, %c0_22, %c0_23] : memref<14x8x512xf32, #tpu.memory_space<vmem>>, vector<1x8x512xf32>
    %37 = vector.shape_cast %36 : vector<1x8x512xf32> to vector<8x512xf32>
    %38 = arith.mulf %35, %37 : vector<8x512xf32>
    %39 = arith.truncf %38 : vector<8x512xf32> to vector<8x512xbf16>
    %c1_24 = arith.constant 1 : index
    %c0_25 = arith.constant 0 : index
    %c0_26 = arith.constant 0 : index
    %40 = vector.load %arg2[%c1_24, %c0_25, %c0_26] : memref<9x8x8xbf16, #tpu.memory_space<vmem>>, vector<1x8x8xbf16>
    %41 = vector.shape_cast %40 : vector<1x8x8xbf16> to vector<8x8xbf16>
    %cst_27 = arith.constant dense<0.000000e+00> : vector<8x512xf32>
    %42 = tpu.matmul %41, %39, %cst_27 {dimension_numbers = #tpu.dot_dimension_numbers<[1], [0], [0], [1], [0, 0, 1, 1], [], []>} : vector<8x8xbf16>, vector<8x512xbf16>, vector<8x512xf32> -> vector<8x512xf32>
    %43 = arith.addf %34, %42 : vector<8x512xf32>
    %c15_i32 = arith.constant 15 : i32
    %44 = tpu.dynamic_rotate %26 by %c15_i32 dim 1 : vector<8x512xf32>, i32 -> vector<8x512xf32>
    %c6 = arith.constant 6 : index
    %c0_28 = arith.constant 0 : index
    %c0_29 = arith.constant 0 : index
    %45 = vector.load %arg4[%c6, %c0_28, %c0_29] : memref<14x8x512xf32, #tpu.memory_space<vmem>>, vector<1x8x512xf32>
    %46 = vector.shape_cast %45 : vector<1x8x512xf32> to vector<8x512xf32>
    %47 = arith.mulf %44, %46 : vector<8x512xf32>
    %48 = arith.truncf %47 : vector<8x512xf32> to vector<8x512xbf16>
    %c2_30 = arith.constant 2 : index
    %c0_31 = arith.constant 0 : index
    %c0_32 = arith.constant 0 : index
    %49 = vector.load %arg2[%c2_30, %c0_31, %c0_32] : memref<9x8x8xbf16, #tpu.memory_space<vmem>>, vector<1x8x8xbf16>
    %50 = vector.shape_cast %49 : vector<1x8x8xbf16> to vector<8x8xbf16>
    %cst_33 = arith.constant dense<0.000000e+00> : vector<8x512xf32>
    %51 = tpu.matmul %50, %48, %cst_33 {dimension_numbers = #tpu.dot_dimension_numbers<[1], [0], [0], [1], [0, 0, 1, 1], [], []>} : vector<8x8xbf16>, vector<8x512xbf16>, vector<8x512xf32> -> vector<8x512xf32>
    %52 = arith.addf %43, %51 : vector<8x512xf32>
    %c1_i32_34 = arith.constant 1 : i32
    %53 = tpu.dynamic_rotate %26 by %c1_i32_34 dim 1 : vector<8x512xf32>, i32 -> vector<8x512xf32>
    %c7 = arith.constant 7 : index
    %c0_35 = arith.constant 0 : index
    %c0_36 = arith.constant 0 : index
    %54 = vector.load %arg4[%c7, %c0_35, %c0_36] : memref<14x8x512xf32, #tpu.memory_space<vmem>>, vector<1x8x512xf32>
    %55 = vector.shape_cast %54 : vector<1x8x512xf32> to vector<8x512xf32>
    %56 = arith.mulf %53, %55 : vector<8x512xf32>
    %57 = arith.truncf %56 : vector<8x512xf32> to vector<8x512xbf16>
    %c3_37 = arith.constant 3 : index
    %c0_38 = arith.constant 0 : index
    %c0_39 = arith.constant 0 : index
    %58 = vector.load %arg2[%c3_37, %c0_38, %c0_39] : memref<9x8x8xbf16, #tpu.memory_space<vmem>>, vector<1x8x8xbf16>
    %59 = vector.shape_cast %58 : vector<1x8x8xbf16> to vector<8x8xbf16>
    %cst_40 = arith.constant dense<0.000000e+00> : vector<8x512xf32>
    %60 = tpu.matmul %59, %57, %cst_40 {dimension_numbers = #tpu.dot_dimension_numbers<[1], [0], [0], [1], [0, 0, 1, 1], [], []>} : vector<8x8xbf16>, vector<8x512xbf16>, vector<8x512xf32> -> vector<8x512xf32>
    %61 = arith.addf %52, %60 : vector<8x512xf32>
    %c8 = arith.constant 8 : index
    %c0_41 = arith.constant 0 : index
    %c0_42 = arith.constant 0 : index
    %62 = vector.load %arg4[%c8, %c0_41, %c0_42] : memref<14x8x512xf32, #tpu.memory_space<vmem>>, vector<1x8x512xf32>
    %63 = vector.shape_cast %62 : vector<1x8x512xf32> to vector<8x512xf32>
    %64 = arith.mulf %26, %63 : vector<8x512xf32>
    %65 = arith.truncf %64 : vector<8x512xf32> to vector<8x512xbf16>
    %c4_43 = arith.constant 4 : index
    %c0_44 = arith.constant 0 : index
    %c0_45 = arith.constant 0 : index
    %66 = vector.load %arg2[%c4_43, %c0_44, %c0_45] : memref<9x8x8xbf16, #tpu.memory_space<vmem>>, vector<1x8x8xbf16>
    %67 = vector.shape_cast %66 : vector<1x8x8xbf16> to vector<8x8xbf16>
    %cst_46 = arith.constant dense<0.000000e+00> : vector<8x512xf32>
    %68 = tpu.matmul %67, %65, %cst_46 {dimension_numbers = #tpu.dot_dimension_numbers<[1], [0], [0], [1], [0, 0, 1, 1], [], []>} : vector<8x8xbf16>, vector<8x512xbf16>, vector<8x512xf32> -> vector<8x512xf32>
    %69 = arith.addf %61, %68 : vector<8x512xf32>
    %c511_i32 = arith.constant 511 : i32
    %70 = tpu.dynamic_rotate %26 by %c511_i32 dim 1 : vector<8x512xf32>, i32 -> vector<8x512xf32>
    %c9 = arith.constant 9 : index
    %c0_47 = arith.constant 0 : index
    %c0_48 = arith.constant 0 : index
    %71 = vector.load %arg4[%c9, %c0_47, %c0_48] : memref<14x8x512xf32, #tpu.memory_space<vmem>>, vector<1x8x512xf32>
    %72 = vector.shape_cast %71 : vector<1x8x512xf32> to vector<8x512xf32>
    %73 = arith.mulf %70, %72 : vector<8x512xf32>
    %74 = arith.truncf %73 : vector<8x512xf32> to vector<8x512xbf16>
    %c5_49 = arith.constant 5 : index
    %c0_50 = arith.constant 0 : index
    %c0_51 = arith.constant 0 : index
    %75 = vector.load %arg2[%c5_49, %c0_50, %c0_51] : memref<9x8x8xbf16, #tpu.memory_space<vmem>>, vector<1x8x8xbf16>
    %76 = vector.shape_cast %75 : vector<1x8x8xbf16> to vector<8x8xbf16>
    %cst_52 = arith.constant dense<0.000000e+00> : vector<8x512xf32>
    %77 = tpu.matmul %76, %74, %cst_52 {dimension_numbers = #tpu.dot_dimension_numbers<[1], [0], [0], [1], [0, 0, 1, 1], [], []>} : vector<8x8xbf16>, vector<8x512xbf16>, vector<8x512xf32> -> vector<8x512xf32>
    %78 = arith.addf %69, %77 : vector<8x512xf32>
    %c497_i32 = arith.constant 497 : i32
    %79 = tpu.dynamic_rotate %26 by %c497_i32 dim 1 : vector<8x512xf32>, i32 -> vector<8x512xf32>
    %c10 = arith.constant 10 : index
    %c0_53 = arith.constant 0 : index
    %c0_54 = arith.constant 0 : index
    %80 = vector.load %arg4[%c10, %c0_53, %c0_54] : memref<14x8x512xf32, #tpu.memory_space<vmem>>, vector<1x8x512xf32>
    %81 = vector.shape_cast %80 : vector<1x8x512xf32> to vector<8x512xf32>
    %82 = arith.mulf %79, %81 : vector<8x512xf32>
    %83 = arith.truncf %82 : vector<8x512xf32> to vector<8x512xbf16>
    %c6_55 = arith.constant 6 : index
    %c0_56 = arith.constant 0 : index
    %c0_57 = arith.constant 0 : index
    %84 = vector.load %arg2[%c6_55, %c0_56, %c0_57] : memref<9x8x8xbf16, #tpu.memory_space<vmem>>, vector<1x8x8xbf16>
    %85 = vector.shape_cast %84 : vector<1x8x8xbf16> to vector<8x8xbf16>
    %cst_58 = arith.constant dense<0.000000e+00> : vector<8x512xf32>
    %86 = tpu.matmul %85, %83, %cst_58 {dimension_numbers = #tpu.dot_dimension_numbers<[1], [0], [0], [1], [0, 0, 1, 1], [], []>} : vector<8x8xbf16>, vector<8x512xbf16>, vector<8x512xf32> -> vector<8x512xf32>
    %87 = arith.addf %78, %86 : vector<8x512xf32>
    %c496_i32 = arith.constant 496 : i32
    %88 = tpu.dynamic_rotate %26 by %c496_i32 dim 1 : vector<8x512xf32>, i32 -> vector<8x512xf32>
    %c11 = arith.constant 11 : index
    %c0_59 = arith.constant 0 : index
    %c0_60 = arith.constant 0 : index
    %89 = vector.load %arg4[%c11, %c0_59, %c0_60] : memref<14x8x512xf32, #tpu.memory_space<vmem>>, vector<1x8x512xf32>
    %90 = vector.shape_cast %89 : vector<1x8x512xf32> to vector<8x512xf32>
    %91 = arith.mulf %88, %90 : vector<8x512xf32>
    %92 = arith.truncf %91 : vector<8x512xf32> to vector<8x512xbf16>
    %c7_61 = arith.constant 7 : index
    %c0_62 = arith.constant 0 : index
    %c0_63 = arith.constant 0 : index
    %93 = vector.load %arg2[%c7_61, %c0_62, %c0_63] : memref<9x8x8xbf16, #tpu.memory_space<vmem>>, vector<1x8x8xbf16>
    %94 = vector.shape_cast %93 : vector<1x8x8xbf16> to vector<8x8xbf16>
    %cst_64 = arith.constant dense<0.000000e+00> : vector<8x512xf32>
    %95 = tpu.matmul %94, %92, %cst_64 {dimension_numbers = #tpu.dot_dimension_numbers<[1], [0], [0], [1], [0, 0, 1, 1], [], []>} : vector<8x8xbf16>, vector<8x512xbf16>, vector<8x512xf32> -> vector<8x512xf32>
    %96 = arith.addf %87, %95 : vector<8x512xf32>
    %c495_i32 = arith.constant 495 : i32
    %97 = tpu.dynamic_rotate %26 by %c495_i32 dim 1 : vector<8x512xf32>, i32 -> vector<8x512xf32>
    %c12 = arith.constant 12 : index
    %c0_65 = arith.constant 0 : index
    %c0_66 = arith.constant 0 : index
    %98 = vector.load %arg4[%c12, %c0_65, %c0_66] : memref<14x8x512xf32, #tpu.memory_space<vmem>>, vector<1x8x512xf32>
    %99 = vector.shape_cast %98 : vector<1x8x512xf32> to vector<8x512xf32>
    %100 = arith.mulf %97, %99 : vector<8x512xf32>
    %101 = arith.truncf %100 : vector<8x512xf32> to vector<8x512xbf16>
    %c8_67 = arith.constant 8 : index
    %c0_68 = arith.constant 0 : index
    %c0_69 = arith.constant 0 : index
    %102 = vector.load %arg2[%c8_67, %c0_68, %c0_69] : memref<9x8x8xbf16, #tpu.memory_space<vmem>>, vector<1x8x8xbf16>
    %103 = vector.shape_cast %102 : vector<1x8x8xbf16> to vector<8x8xbf16>
    %cst_70 = arith.constant dense<0.000000e+00> : vector<8x512xf32>
    %104 = tpu.matmul %103, %101, %cst_70 {dimension_numbers = #tpu.dot_dimension_numbers<[1], [0], [0], [1], [0, 0, 1, 1], [], []>} : vector<8x8xbf16>, vector<8x512xbf16>, vector<8x512xf32> -> vector<8x512xf32>
    %105 = arith.addf %96, %104 : vector<8x512xf32>
    %106 = vector.extract_strided_slice %0 {offsets = [0, 0], sizes = [8, 8], strides = [1, 1]} : vector<8x128xf32> to vector<8x8xf32>
    %107 = vector.extract_strided_slice %105 {offsets = [0, 0], sizes = [8, 256], strides = [1, 1]} : vector<8x512xf32> to vector<8x256xf32>
    %cst_71 = arith.constant dense<0.000000e+00> : vector<8xf32>
    %108 = vector.multi_reduction <add>, %107, %cst_71 [1] : vector<8x256xf32> to vector<8xf32>
    %109 = vector.shape_cast %108 : vector<8xf32> to vector<8x1xf32>
    %110 = vector.extract_strided_slice %105 {offsets = [0, 256], sizes = [8, 256], strides = [1, 1]} : vector<8x512xf32> to vector<8x256xf32>
    %cst_72 = arith.constant dense<0.000000e+00> : vector<8xf32>
    %111 = vector.multi_reduction <add>, %110, %cst_72 [1] : vector<8x256xf32> to vector<8xf32>
    %112 = vector.shape_cast %111 : vector<8xf32> to vector<8x1xf32>
    %113 = tpu.concatenate %109, %112 in 1 : vector<8x1xf32>, vector<8x1xf32> -> vector<8x2xf32>
    %cst_73 = arith.constant dense<0.000000e+00> : vector<8x2xf32>
    %114 = tpu.matmul %106, %113, %cst_73 {dimension_numbers = #tpu.dot_dimension_numbers<[1], [0], [0], [1], [0, 0, 1, 1], [], []>} : vector<8x8xf32>, vector<8x2xf32>, vector<8x2xf32> -> vector<8x2xf32>
    %115 = vector.extract_strided_slice %105 {offsets = [0, 0], sizes = [8, 256], strides = [1, 1]} : vector<8x512xf32> to vector<8x256xf32>
    %116 = vector.extract_strided_slice %114 {offsets = [0, 0], sizes = [8, 1], strides = [1, 1]} : vector<8x2xf32> to vector<8x1xf32>
    %117 = vector.broadcast %116 : vector<8x1xf32> to vector<8x256xf32>
    %118 = arith.subf %115, %117 : vector<8x256xf32>
    %119 = vector.extract_strided_slice %105 {offsets = [0, 256], sizes = [8, 256], strides = [1, 1]} : vector<8x512xf32> to vector<8x256xf32>
    %120 = vector.extract_strided_slice %114 {offsets = [0, 1], sizes = [8, 1], strides = [1, 1]} : vector<8x2xf32> to vector<8x1xf32>
    %121 = vector.broadcast %120 : vector<8x1xf32> to vector<8x256xf32>
    %122 = arith.subf %119, %121 : vector<8x256xf32>
    %123 = arith.mulf %118, %118 : vector<8x256xf32>
    %cst_74 = arith.constant dense<0.000000e+00> : vector<8xf32>
    %124 = vector.multi_reduction <add>, %123, %cst_74 [1] : vector<8x256xf32> to vector<8xf32>
    %125 = vector.shape_cast %124 : vector<8xf32> to vector<8x1xf32>
    %126 = arith.mulf %122, %122 : vector<8x256xf32>
    %cst_75 = arith.constant dense<0.000000e+00> : vector<8xf32>
    %127 = vector.multi_reduction <add>, %126, %cst_75 [1] : vector<8x256xf32> to vector<8xf32>
    %128 = vector.shape_cast %127 : vector<8xf32> to vector<8x1xf32>
    %129 = tpu.concatenate %125, %128 in 1 : vector<8x1xf32>, vector<8x1xf32> -> vector<8x2xf32>
    %cst_76 = arith.constant dense<0.000000e+00> : vector<8x2xf32>
    %130 = tpu.matmul %106, %129, %cst_76 {dimension_numbers = #tpu.dot_dimension_numbers<[1], [0], [0], [1], [0, 0, 1, 1], [], []>} : vector<8x8xf32>, vector<8x2xf32>, vector<8x2xf32> -> vector<8x2xf32>
    %cst_77 = arith.constant 9.99999974E-6 : f32
    %131 = vector.broadcast %cst_77 : f32 to vector<8x2xf32>
    %132 = arith.addf %130, %131 : vector<8x2xf32>
    %133 = math.rsqrt %132 : vector<8x2xf32>
    %134 = vector.extract_strided_slice %0 {offsets = [0, 8], sizes = [8, 1], strides = [1, 1]} : vector<8x128xf32> to vector<8x1xf32>
    %135 = vector.extract_strided_slice %0 {offsets = [0, 9], sizes = [8, 1], strides = [1, 1]} : vector<8x128xf32> to vector<8x1xf32>
    %136 = vector.extract_strided_slice %0 {offsets = [0, 10], sizes = [8, 1], strides = [1, 1]} : vector<8x128xf32> to vector<8x1xf32>
    %137 = vector.extract_strided_slice %0 {offsets = [0, 11], sizes = [1, 1], strides = [1, 1]} : vector<8x128xf32> to vector<1x1xf32>
    %138 = vector.extract_strided_slice %25 {offsets = [0, 0], sizes = [1, 256], strides = [1, 1]} : vector<8x512xf32> to vector<1x256xf32>
    %139 = vector.extract_strided_slice %133 {offsets = [0, 0], sizes = [8, 1], strides = [1, 1]} : vector<8x2xf32> to vector<8x1xf32>
    %140 = vector.broadcast %139 : vector<8x1xf32> to vector<8x256xf32>
    %141 = arith.mulf %118, %140 : vector<8x256xf32>
    %142 = vector.broadcast %134 : vector<8x1xf32> to vector<8x256xf32>
    %143 = arith.mulf %141, %142 : vector<8x256xf32>
    %144 = vector.broadcast %135 : vector<8x1xf32> to vector<8x256xf32>
    %145 = arith.addf %143, %144 : vector<8x256xf32>
    %cst_78 = arith.constant 0.000000e+00 : f32
    %146 = vector.broadcast %cst_78 : f32 to vector<8x256xf32>
    %147 = arith.maximumf %145, %146 : vector<8x256xf32>
    %148 = vector.broadcast %136 : vector<8x1xf32> to vector<8x256xf32>
    %149 = arith.mulf %147, %148 : vector<8x256xf32>
    %cst_79 = arith.constant dense<0.000000e+00> : vector<256xf32>
    %150 = vector.multi_reduction <add>, %149, %cst_79 [0] : vector<8x256xf32> to vector<256xf32>
    %151 = vector.shape_cast %150 : vector<256xf32> to vector<1x256xf32>
    %152 = vector.broadcast %137 : vector<1x1xf32> to vector<1x256xf32>
    %153 = arith.addf %151, %152 : vector<1x256xf32>
    %154 = arith.negf %153 : vector<1x256xf32>
    %155 = math.exp %154 : vector<1x256xf32>
    %cst_80 = arith.constant 1.000000e+00 : f32
    %156 = vector.broadcast %cst_80 : f32 to vector<1x256xf32>
    %157 = arith.addf %156, %155 : vector<1x256xf32>
    %158 = arith.divf %156, %157 : vector<1x256xf32>
    %159 = arith.mulf %158, %138 : vector<1x256xf32>
    %160 = vector.extract_strided_slice %133 {offsets = [0, 1], sizes = [8, 1], strides = [1, 1]} : vector<8x2xf32> to vector<8x1xf32>
    %161 = vector.broadcast %160 : vector<8x1xf32> to vector<8x256xf32>
    %162 = arith.mulf %122, %161 : vector<8x256xf32>
    %163 = vector.broadcast %134 : vector<8x1xf32> to vector<8x256xf32>
    %164 = arith.mulf %162, %163 : vector<8x256xf32>
    %165 = vector.broadcast %135 : vector<8x1xf32> to vector<8x256xf32>
    %166 = arith.addf %164, %165 : vector<8x256xf32>
    %cst_81 = arith.constant 0.000000e+00 : f32
    %167 = vector.broadcast %cst_81 : f32 to vector<8x256xf32>
    %168 = arith.maximumf %166, %167 : vector<8x256xf32>
    %169 = vector.broadcast %136 : vector<8x1xf32> to vector<8x256xf32>
    %170 = arith.mulf %168, %169 : vector<8x256xf32>
    %cst_82 = arith.constant dense<0.000000e+00> : vector<256xf32>
    %171 = vector.multi_reduction <add>, %170, %cst_82 [0] : vector<8x256xf32> to vector<256xf32>
    %172 = vector.shape_cast %171 : vector<256xf32> to vector<1x256xf32>
    %173 = vector.broadcast %137 : vector<1x1xf32> to vector<1x256xf32>
    %174 = arith.addf %172, %173 : vector<1x256xf32>
    %175 = arith.negf %174 : vector<1x256xf32>
    %176 = math.exp %175 : vector<1x256xf32>
    %cst_83 = arith.constant 1.000000e+00 : f32
    %177 = vector.broadcast %cst_83 : f32 to vector<1x256xf32>
    %178 = arith.addf %177, %176 : vector<1x256xf32>
    %179 = arith.divf %177, %178 : vector<1x256xf32>
    %180 = arith.mulf %179, %138 : vector<1x256xf32>
    %181 = tpu.concatenate %159, %180 in 1 : vector<1x256xf32>, vector<1x256xf32> -> vector<1x512xf32>
    %c0_84 = arith.constant 0 : index
    %c0_85 = arith.constant 0 : index
    %182 = vector.load %arg5[%c0_84, %c0_85] : memref<1x512xf32, #tpu.memory_space<vmem>>, vector<1x512xf32>
    tpu.vector_store %arg5[%c0_84, %c0_85], %181 {strides = array<i32>} : memref<1x512xf32, #tpu.memory_space<vmem>>, vector<1x512xf32>,
    return
  }
}

</mosaic_0001>

<llo_original>
// kernel: tpu_custom_call.1
$region0: #{tpu_custom_call.1}
  #allocation0 [shape = 'u32[]', space=smem, size = 0x4, offset = 0x4, fixed_abs, tag = 'smem constant byte address 0x4 - core index']
  #allocation1 [shape = 'u32[144,128]{1,0:T(1,128)}', space=vmem, size = 0x12000, scoped, tag = 'internal scratch']
  %s0 = inlined_call_operand.vmem [shape: f32[8,32], index: 0, kind: input, shape index: {}]
  %s1 = inlined_call_operand.hbm [shape: f32[32,512], index: 1, kind: input, shape index: {}]
  %s2 = inlined_call_operand.vmem [shape: bf16[9,8,8], index: 2, kind: input, shape index: {}]
  %s3 = inlined_call_operand.vmem [shape: f32[8,128], index: 3, kind: input, shape index: {}]
  %s4 = inlined_call_operand.hbm [shape: f32[14,8,512], index: 4, kind: input, shape index: {}]
  %s5 = inlined_call_operand.hbm [shape: f32[1,512], index: 5, kind: output, shape index: {}]
  %s6 = sld [smem:[#allocation0]]
  $region38: #{tpu_custom_call.1} parent=0
    _
  %s8 = ssub.s32 1, %s6
  %s9 = scalar_select 0, %s8, %s6
  $region1: #{tpu_custom_call.1} parent=0
    #allocation2 [shape = 'u8[65536]{0}', space=vmem, size = 0x10000, scoped, tag = 'input window, operand 1, single buffered']
    #allocation3 [shape = 's32[1]{0}', space=sflag, size = 0x4, scoped, tag = 'scoped memory for tpu_custom_call.1']
    #allocation4 [shape = 's32[1]{0}', space=sflag, size = 0x4, scoped, tag = 'scoped memory for tpu_custom_call.1']
    #allocation5 [shape = 'u8[229376]{0}', space=vmem, size = 0x38000, scoped, tag = 'input window, operand 4, single buffered']
    #allocation6 [shape = 's32[1]{0}', space=sflag, size = 0x4, scoped, tag = 'scoped memory for tpu_custom_call.1']
    #allocation7 [shape = 'u8[2048]{0}', space=vmem, size = 0x800, scoped, tag = 'output window, operand 0, single buffered']
    %10 = vsyncpa [#allocation3], 0
    %11 = vsyncpa [#allocation6], 0
    %12 = vsyncpa [#allocation4], 0
    // Predicated region
    $region2: #{tpu_custom_call.1} parent=1 // pred_check
      _
    $region3: #{tpu_custom_call.1} parent=1 // pred_check_branch
      %14 = sbr.rel (0) target = $region5
    $region4: #{tpu_custom_call.1} parent=1 // pred_region
      _
    $region5: #{tpu_custom_call.1} parent=1 // pred_fallthru
      _
    // Predicated region
    $region6: #{tpu_custom_call.1} parent=1 // pred_check
      _
    $region7: #{tpu_custom_call.1} parent=1 // pred_check_branch
      %16 = sbr.rel (0) target = $region9
    $region8: #{tpu_custom_call.1} parent=1 // pred_region
      %s18 = ssub.s32 2048, 2048
      %19 = vsyncadd [#allocation3], %s18
      %s20 = sshll.u32 [#allocation2], 4
      %s21 = int_to_ptr.vmem [resolvable:$true] %s20
      %26 = dma.hbm_to_vmem [thread:$0]  %s1, 2048, %s21, [#allocation3], 512, 512, 32
    $region9: #{tpu_custom_call.1} parent=1 // pred_fallthru
      _
    // Predicated region
    $region10: #{tpu_custom_call.1} parent=1 // pred_check
      _
    $region11: #{tpu_custom_call.1} parent=1 // pred_check_branch
      %28 = sbr.rel (0) target = $region13
    $region12: #{tpu_custom_call.1} parent=1 // pred_region
      _
    $region13: #{tpu_custom_call.1} parent=1 // pred_fallthru
      _
    // Predicated region
    $region14: #{tpu_custom_call.1} parent=1 // pred_check
      _
    $region15: #{tpu_custom_call.1} parent=1 // pred_check_branch
      %30 = sbr.rel (0) target = $region17
    $region16: #{tpu_custom_call.1} parent=1 // pred_region
      _
    $region17: #{tpu_custom_call.1} parent=1 // pred_fallthru
      _
    // Predicated region
    $region18: #{tpu_custom_call.1} parent=1 // pred_check
      _
    $region19: #{tpu_custom_call.1} parent=1 // pred_check_branch
      %32 = sbr.rel (0) target = $region21
    $region20: #{tpu_custom_call.1} parent=1 // pred_region
      %s34 = ssub.s32 7168, 7168
      %35 = vsyncadd [#allocation6], %s34
      %s36 = sshll.u32 [#allocation5], 4
      %s37 = int_to_ptr.vmem [resolvable:$true] %s36
      %42 = dma.hbm_to_vmem [thread:$0]  %s4, 7168, %s37, [#allocation6], 512, 512, 32
    $region21: #{tpu_custom_call.1} parent=1 // pred_fallthru
      _
    // Predicated region
    $region22: #{tpu_custom_call.1} parent=1 // pred_check
      _
    $region23: #{tpu_custom_call.1} parent=1 // pred_check_branch
      %44 = sbr.rel (0) target = $region25
    $region24: #{tpu_custom_call.1} parent=1 // pred_region
      %45 = dma.done [#allocation3], 2048
    $region25: #{tpu_custom_call.1} parent=1 // pred_fallthru
      _
    // Predicated region
    $region26: #{tpu_custom_call.1} parent=1 // pred_check
      _
    $region27: #{tpu_custom_call.1} parent=1 // pred_check_branch
      %47 = sbr.rel (0) target = $region29
    $region28: #{tpu_custom_call.1} parent=1 // pred_region
      %48 = dma.done [#allocation6], 7168
    $region29: #{tpu_custom_call.1} parent=1 // pred_fallthru
      _
    %v50 = vld [vmem:[%s3] sm:$0xff]
    %v51 = vld [vmem:[%s0] sm:$0xff]
    %v52 = vld [vmem:[#allocation2] sm:$0xff]
    %v53 = vld [vmem:[#allocation2 + $0x8] sm:$0xff]
    %v54 = vld [vmem:[#allocation2 + $0x10] sm:$0xff]
    %v55 = vld [vmem:[#allocation2 + $0x18] sm:$0xff]
    %v56 = vld [vmem:[#allocation2 + $0x20] sm:$0xff]
    %v57 = vld [vmem:[#allocation2 + $0x28] sm:$0xff]
    %v58 = vld [vmem:[#allocation2 + $0x30] sm:$0xff]
    %v59 = vld [vmem:[#allocation2 + $0x38] sm:$0xff]
    %v60 = vld [vmem:[#allocation2 + $0x40] sm:$0xff]
    %v61 = vld [vmem:[#allocation2 + $0x48] sm:$0xff]
    %v62 = vld [vmem:[#allocation2 + $0x50] sm:$0xff]
    %v63 = vld [vmem:[#allocation2 + $0x58] sm:$0xff]
    %v64 = vld [vmem:[#allocation2 + $0x60] sm:$0xff]
    %v65 = vld [vmem:[#allocation2 + $0x68] sm:$0xff]
    %v66 = vld [vmem:[#allocation2 + $0x70] sm:$0xff]
    %v67 = vld [vmem:[#allocation2 + $0x78] sm:$0xff]
    %vm68 = vcmask 261120
    %v70 = vsel %vm68, %v51, 0
    %72 = vmatprep.subr.mxu0 %v53
    %73 = vmatpush1.msra.mxu0 %v52
    %74 = vmatprep.subr.mxu0 %v57
    %75 = vmatpush1.msra.mxu0 %v56
    %76 = vmatprep.subr.mxu0 %v61
    %77 = vmatpush1.msra.mxu0 %v60
    %78 = vmatprep.subr.mxu0 %v65
    %79 = vmatpush1.msra.mxu0 %v64
    %80 = vmatprep.subr.mxu0 0.0
    %81 = vmatpush1.msra.mxu0 0.0
    %82 = vmatprep.subr.mxu0 0.0
    %83 = vmatpush1.msra.mxu0 0.0
    %84 = vmatprep.subr.mxu0 0.0
    %85 = vmatpush1.msra.mxu0 0.0
    %86 = vmatprep.subr.mxu0 0.0
    %87 = vmatpush1.msra.mxu0 0.0
    %88 = vmatprep.subr.mxu0 0.0
    %89 = vmatpush1.msra.mxu0 0.0
    %90 = vmatprep.subr.mxu0 0.0
    %91 = vmatpush1.msra.mxu0 0.0
    %92 = vmatprep.subr.mxu0 0.0
    %93 = vmatpush1.msra.mxu0 0.0
    %94 = vmatprep.subr.mxu0 0.0
    %95 = vmatpush1.msra.mxu0 0.0
    %96 = vmatprep.subr.mxu0 0.0
    %97 = vmatpush1.msra.mxu0 0.0
    %98 = vmatprep.subr.mxu0 0.0
    %99 = vmatpush1.msra.mxu0 0.0
    %100 = vmatprep.subr.mxu0 0.0
    %101 = vmatpush1.msra.mxu0 0.0
    %102 = vmatprep.subr.mxu0 0.0
    %103 = vmatpush1.msra.mxu0 0.0
    %104 = vmatprep.subr.mxu0 0.0
    %105 = vmatpush1.msra.mxu0 0.0
    %106 = vmatprep.subr.mxu0 0.0
    %107 = vmatpush1.msra.mxu0 0.0
    %108 = vmatprep.subr.mxu0 0.0
    %109 = vmatpush1.msra.mxu0 0.0
    %110 = vmatprep.subr.mxu0 0.0
    %111 = vmatpush1.msra.mxu0 0.0
    %112 = vmatprep.subr.mxu0 0.0
    %113 = vmatpush1.msra.mxu0 0.0
    %114 = vmatprep.subr.mxu0 0.0
    %115 = vmatpush1.msra.mxu0 0.0
    %116 = vmatprep.subr.mxu0 0.0
    %117 = vmatpush1.msra.mxu0 0.0
    %118 = vmatprep.subr.mxu0 0.0
    %119 = vmatpush1.msra.mxu0 0.0
    %120 = vmatprep.subr.mxu0 0.0
    %121 = vmatpush1.msra.mxu0 0.0
    %122 = vmatprep.subr.mxu0 0.0
    %123 = vmatpush1.msra.mxu0 0.0
    %124 = vmatprep.subr.mxu0 0.0
    %125 = vmatpush1.msra.mxu0 0.0
    %126 = vmatprep.subr.mxu0 0.0
    %127 = vmatpush1.msra.mxu0 0.0
    %128 = vmatprep.subr.mxu0 0.0
    %129 = vmatpush1.msra.mxu0 0.0
    %130 = vmatprep.subr.mxu0 0.0
    %131 = vmatpush1.msra.mxu0 0.0
    %132 = vmatprep.subr.mxu0 0.0
    %133 = vmatpush1.msra.mxu0 0.0
    %134 = vmatprep.subr.mxu0 0.0
    %135 = vmatpush1.msra.mxu0 0.0
    %136 = vmatprep.mubr.f32.mxu0 0.0
    %137 = vmatmul.mubr.f32.gmra.mrb[0].mxu0 %v70
    %v138 = vpop.f32.mrb[0].mxu0
    %v139 = vadd.f32 0.0, %v138
    %v140 = vpop.f32.mrb[0].mxu0
    %v141 = vadd.f32 0.0, %v140
    %142 = vdwg.mxu0
    %143 = vmatprep.subr.mxu0 %v55
    %144 = vmatpush1.msra.mxu0 %v54
    %145 = vmatprep.subr.mxu0 %v59
    %146 = vmatpush1.msra.mxu0 %v58
    %147 = vmatprep.subr.mxu0 %v63
    %148 = vmatpush1.msra.mxu0 %v62
    %149 = vmatprep.subr.mxu0 %v67
    %150 = vmatpush1.msra.mxu0 %v66
    %151 = vmatprep.subr.mxu0 0.0
    %152 = vmatpush1.msra.mxu0 0.0
    %153 = vmatprep.subr.mxu0 0.0
    %154 = vmatpush1.msra.mxu0 0.0
    %155 = vmatprep.subr.mxu0 0.0
    %156 = vmatpush1.msra.mxu0 0.0
    %157 = vmatprep.subr.mxu0 0.0
    %158 = vmatpush1.msra.mxu0 0.0
    %159 = vmatprep.subr.mxu0 0.0
    %160 = vmatpush1.msra.mxu0 0.0
    %161 = vmatprep.subr.mxu0 0.0
    %162 = vmatpush1.msra.mxu0 0.0
    %163 = vmatprep.subr.mxu0 0.0
    %164 = vmatpush1.msra.mxu0 0.0
    %165 = vmatprep.subr.mxu0 0.0
    %166 = vmatpush1.msra.mxu0 0.0
    %167 = vmatprep.subr.mxu0 0.0
    %168 = vmatpush1.msra.mxu0 0.0
    %169 = vmatprep.subr.mxu0 0.0
    %170 = vmatpush1.msra.mxu0 0.0
    %171 = vmatprep.subr.mxu0 0.0
    %172 = vmatpush1.msra.mxu0 0.0
    %173 = vmatprep.subr.mxu0 0.0
    %174 = vmatpush1.msra.mxu0 0.0
    %175 = vmatprep.subr.mxu0 0.0
    %176 = vmatpush1.msra.mxu0 0.0
    %177 = vmatprep.subr.mxu0 0.0
    %178 = vmatpush1.msra.mxu0 0.0
    %179 = vmatprep.subr.mxu0 0.0
    %180 = vmatpush1.msra.mxu0 0.0
    %181 = vmatprep.subr.mxu0 0.0
    %182 = vmatpush1.msra.mxu0 0.0
    %183 = vmatprep.subr.mxu0 0.0
    %184 = vmatpush1.msra.mxu0 0.0
    %185 = vmatprep.subr.mxu0 0.0
    %186 = vmatpush1.msra.mxu0 0.0
    %187 = vmatprep.subr.mxu0 0.0
    %188 = vmatpush1.msra.mxu0 0.0
    %189 = vmatprep.subr.mxu0 0.0
    %190 = vmatpush1.msra.mxu0 0.0
    %191 = vmatprep.subr.mxu0 0.0
    %192 = vmatpush1.msra.mxu0 0.0
    %193 = vmatprep.subr.mxu0 0.0
    %194 = vmatpush1.msra.mxu0 0.0
    %195 = vmatprep.subr.mxu0 0.0
    %196 = vmatpush1.msra.mxu0 0.0
    %197 = vmatprep.subr.mxu0 0.0
    %198 = vmatpush1.msra.mxu0 0.0
    %199 = vmatprep.subr.mxu0 0.0
    %200 = vmatpush1.msra.mxu0 0.0
    %201 = vmatprep.subr.mxu0 0.0
    %202 = vmatpush1.msra.mxu0 0.0
    %203 = vmatprep.subr.mxu0 0.0
    %204 = vmatpush1.msra.mxu0 0.0
    %205 = vmatprep.subr.mxu0 0.0
    %206 = vmatpush1.msra.mxu0 0.0
    %207 = vmatprep.mubr.f32.mxu0 0.0
    %208 = vmatmul.mubr.f32.gmra.mrb[0].mxu0 %v70
    %v209 = vpop.f32.mrb[0].mxu0
    %v210 = vadd.f32 0.0, %v209
    %v211 = vpop.f32.mrb[0].mxu0
    %v212 = vadd.f32 0.0, %v211
    %213 = vdwg.mxu0
    %214 = vrot.lane.b32.xlu0 %v139, 1
    %v215 = vpop.permute.xlu0 %214
    %216 = vrot.lane.b32.xlu0 %v141, 1
    %v217 = vpop.permute.xlu0 %216
    %218 = vrot.lane.b32.xlu0 %v210, 1
    %v219 = vpop.permute.xlu0 %218
    %220 = vrot.lane.b32.xlu0 %v212, 1
    %v221 = vpop.permute.xlu0 %220
    %v222 = vlaneseq
    %v223 = vand.u32 %v222, 127
    %vm224 = vcmp.lt.s32.totalorder %v223, 1
    %v225 = vsel %vm224, %v219, %v221
    %v226 = vsel %vm224, %v217, %v219
    %v227 = vsel %vm224, %v215, %v217
    %v228 = vsel %vm224, %v221, %v215
    %v229 = vld [vmem:[#allocation5] sm:$0xff]
    %v230 = vld [vmem:[#allocation5 + $0x8] sm:$0xff]
    %v231 = vld [vmem:[#allocation5 + $0x10] sm:$0xff]
    %v232 = vld [vmem:[#allocation5 + $0x18] sm:$0xff]
    %v233 = vadd.f32 %v228, %v229
    %v234 = vadd.f32 %v227, %v230
    %v235 = vadd.f32 %v226, %v231
    %v236 = vadd.f32 %v225, %v232
    %v237 = vmax.f32 %v139, %v233
    %v238 = vmax.f32 %v141, %v234
    %v239 = vmax.f32 %v210, %v235
    %v240 = vmax.f32 %v212, %v236
    %241 = vrot.lane.b32.xlu0 %v237, 2
    %v242 = vpop.permute.xlu0 %241
    %243 = vrot.lane.b32.xlu0 %v238, 2
    %v244 = vpop.permute.xlu0 %243
    %245 = vrot.lane.b32.xlu0 %v239, 2
    %v246 = vpop.permute.xlu0 %245
    %247 = vrot.lane.b32.xlu0 %v240, 2
    %v248 = vpop.permute.xlu0 %247
    %vm249 = vcmp.lt.s32.totalorder %v223, 2
    %v250 = vsel %vm249, %v246, %v248
    %v251 = vsel %vm249, %v244, %v246
    %v252 = vsel %vm249, %v242, %v244
    %v253 = vsel %vm249, %v248, %v242
    %s254 = scalar_lea.vmem [#allocation5], 32
    %v255 = vld [vmem:[%s254] sm:$0xff]
    %v256 = vld [vmem:[%s254 + $0x8] sm:$0xff]
    %v257 = vld [vmem:[%s254 + $0x10] sm:$0xff]
    %v258 = vld [vmem:[%s254 + $0x18] sm:$0xff]
    %v259 = vadd.f32 %v253, %v255
    %v260 = vadd.f32 %v252, %v256
    %v261 = vadd.f32 %v251, %v257
    %v262 = vadd.f32 %v250, %v258
    %v263 = vmax.f32 %v237, %v259
    %v264 = vmax.f32 %v238, %v260
    %v265 = vmax.f32 %v239, %v261
    %v266 = vmax.f32 %v240, %v262
    %267 = vrot.lane.b32.xlu0 %v263, 4
    %v268 = vpop.permute.xlu0 %267
    %269 = vrot.lane.b32.xlu0 %v264, 4
    %v270 = vpop.permute.xlu0 %269
    %271 = vrot.lane.b32.xlu0 %v265, 4
    %v272 = vpop.permute.xlu0 %271
    %273 = vrot.lane.b32.xlu0 %v266, 4
    %v274 = vpop.permute.xlu0 %273
    %vm275 = vcmp.lt.s32.totalorder %v223, 4
    %v276 = vsel %vm275, %v272, %v274
    %v277 = vsel %vm275, %v270, %v272
    %v278 = vsel %vm275, %v268, %v270
    %v279 = vsel %vm275, %v274, %v268
    %s280 = scalar_lea.vmem [#allocation5], 64
    %v281 = vld [vmem:[%s280] sm:$0xff]
    %v282 = vld [vmem:[%s280 + $0x8] sm:$0xff]
    %v283 = vld [vmem:[%s280 + $0x10] sm:$0xff]
    %v284 = vld [vmem:[%s280 + $0x18] sm:$0xff]
    %v285 = vadd.f32 %v279, %v281
    %v286 = vadd.f32 %v278, %v282
    %v287 = vadd.f32 %v277, %v283
    %v288 = vadd.f32 %v276, %v284
    %v289 = vmax.f32 %v263, %v285
    %v290 = vmax.f32 %v264, %v286
    %v291 = vmax.f32 %v265, %v287
    %v292 = vmax.f32 %v266, %v288
    %293 = vrot.lane.b32.xlu0 %v289, 8
    %v294 = vpop.permute.xlu0 %293
    %295 = vrot.lane.b32.xlu0 %v290, 8
    %v296 = vpop.permute.xlu0 %295
    %297 = vrot.lane.b32.xlu0 %v291, 8
    %v298 = vpop.permute.xlu0 %297
    %299 = vrot.lane.b32.xlu0 %v292, 8
    %v300 = vpop.permute.xlu0 %299
    %vm301 = vcmp.lt.s32.totalorder %v223, 8
    %v302 = vsel %vm301, %v298, %v300
    %v303 = vsel %vm301, %v296, %v298
    %v304 = vsel %vm301, %v294, %v296
    %v305 = vsel %vm301, %v300, %v294
    %s306 = scalar_lea.vmem [#allocation5], 96
    %v307 = vld [vmem:[%s306] sm:$0xff]
    %v308 = vld [vmem:[%s306 + $0x8] sm:$0xff]
    %v309 = vld [vmem:[%s306 + $0x10] sm:$0xff]
    %v310 = vld [vmem:[%s306 + $0x18] sm:$0xff]
    %v311 = vadd.f32 %v305, %v307
    %v312 = vadd.f32 %v304, %v308
    %v313 = vadd.f32 %v303, %v309
    %v314 = vadd.f32 %v302, %v310
    %v315 = vmax.f32 %v289, %v311
    %v316 = vmax.f32 %v290, %v312
    %v317 = vmax.f32 %v291, %v313
    %v318 = vmax.f32 %v292, %v314
    %s319 = scalar_lea.vmem [#allocation5], 416
    %v320 = vld [vmem:[%s319] sm:$0xff]
    %v321 = vld [vmem:[%s319 + $0x8] sm:$0xff]
    %v322 = vld [vmem:[%s319 + $0x10] sm:$0xff]
    %v323 = vld [vmem:[%s319 + $0x18] sm:$0xff]
    %v324 = vmul.f32 %v315, %v320
    %v325 = vmul.f32 %v316, %v321
    %v326 = vmul.f32 %v317, %v322
    %v327 = vmul.f32 %v318, %v323
    %328 = vrot.lane.b32.xlu0 %v324, 17
    %v329 = vpop.permute.xlu0 %328
    %330 = vrot.lane.b32.xlu0 %v325, 17
    %v331 = vpop.permute.xlu0 %330
    %332 = vrot.lane.b32.xlu0 %v326, 17
    %v333 = vpop.permute.xlu0 %332
    %334 = vrot.lane.b32.xlu0 %v327, 17
    %v335 = vpop.permute.xlu0 %334
    %vm336 = vcmp.lt.s32.totalorder %v223, 17
    %v337 = vsel %vm336, %v333, %v335
    %v338 = vsel %vm336, %v331, %v333
    %v339 = vsel %vm336, %v329, %v331
    %v340 = vsel %vm336, %v335, %v329
    %s341 = scalar_lea.vmem [#allocation5], 128
    %v342 = vld [vmem:[%s341] sm:$0xff]
    %v343 = vld [vmem:[%s341 + $0x8] sm:$0xff]
    %v344 = vld [vmem:[%s341 + $0x10] sm:$0xff]
    %v345 = vld [vmem:[%s341 + $0x18] sm:$0xff]
    %v346 = vmul.f32 %v340, %v342
    %v347 = vmul.f32 %v339, %v343
    %v348 = vmul.f32 %v338, %v344
    %v349 = vmul.f32 %v337, %v345
    %v350 = vpack.c.bf16 %v346, %v346
    %v351 = vpack.c.bf16 %v347, %v347
    %v352 = vpack.c.bf16 %v348, %v348
    %v353 = vpack.c.bf16 %v349, %v349
    %v354 = vld [vmem:[%s2] sm:$0xf]
    %355 = vrot.lane.b32.xlu0 %v324, 16
    %v356 = vpop.permute.xlu0 %355
    %357 = vrot.lane.b32.xlu0 %v325, 16
    %v358 = vpop.permute.xlu0 %357
    %359 = vrot.lane.b32.xlu0 %v326, 16
    %v360 = vpop.permute.xlu0 %359
    %361 = vrot.lane.b32.xlu0 %v327, 16
    %v362 = vpop.permute.xlu0 %361
    %vm363 = vcmp.lt.s32.totalorder %v223, 16
    %v364 = vsel %vm363, %v360, %v362
    %v365 = vsel %vm363, %v358, %v360
    %v366 = vsel %vm363, %v356, %v358
    %v367 = vsel %vm363, %v362, %v356
    %s368 = scalar_lea.vmem [#allocation5], 160
    %v369 = vld [vmem:[%s368] sm:$0xff]
    %v370 = vld [vmem:[%s368 + $0x8] sm:$0xff]
    %v371 = vld [vmem:[%s368 + $0x10] sm:$0xff]
    %v372 = vld [vmem:[%s368 + $0x18] sm:$0xff]
    %v373 = vmul.f32 %v367, %v369
    %v374 = vmul.f32 %v366, %v370
    %v375 = vmul.f32 %v365, %v371
    %v376 = vmul.f32 %v364, %v372
    %v377 = vpack.c.bf16 %v373, %v373
    %v378 = vpack.c.bf16 %v374, %v374
    %v379 = vpack.c.bf16 %v375, %v375
    %v380 = vpack.c.bf16 %v376, %v376
    %s381 = scalar_lea.vmem %s2, 4
    %v382 = vld [vmem:[%s381] sm:$0xf]
    %vm383 = vcmask 64512
    %v385 = vsel %vm383, %v382, 0
    %vm387 = vcmask 1043456
    %v389 = vsel %vm387, %v377, 0
    %v392 = vsel %vm387, %v378, 0
    %v395 = vsel %vm387, %v379, 0
    %v398 = vsel %vm387, %v380, 0
    %400 = vmatprep.subr.bf16.mxu0 %v392
    %401 = vmatpush1.bf16.msra.mxu0 %v389
    %402 = vmatprep.subr.bf16.mxu0 0
    %403 = vmatpush1.bf16.msra.mxu0 0
    %404 = vmatprep.subr.bf16.mxu0 0
    %405 = vmatpush1.bf16.msra.mxu0 0
    %406 = vmatprep.subr.bf16.mxu0 0
    %407 = vmatpush1.bf16.msra.mxu0 0
    %408 = vmatprep.subr.bf16.mxu0 0
    %409 = vmatpush1.bf16.msra.mxu0 0
    %410 = vmatprep.subr.bf16.mxu0 0
    %411 = vmatpush1.bf16.msra.mxu0 0
    %412 = vmatprep.subr.bf16.mxu0 0
    %413 = vmatpush1.bf16.msra.mxu0 0
    %414 = vmatprep.subr.bf16.mxu0 0
    %415 = vmatpush1.bf16.msra.mxu0 0
    %416 = vmatprep.subr.bf16.mxu0 0
    %417 = vmatpush1.bf16.msra.mxu0 0
    %418 = vmatprep.subr.bf16.mxu0 0
    %419 = vmatpush1.bf16.msra.mxu0 0
    %420 = vmatprep.subr.bf16.mxu0 0
    %421 = vmatpush1.bf16.msra.mxu0 0
    %422 = vmatprep.subr.bf16.mxu0 0
    %423 = vmatpush1.bf16.msra.mxu0 0
    %424 = vmatprep.subr.bf16.mxu0 0
    %425 = vmatpush1.bf16.msra.mxu0 0
    %426 = vmatprep.subr.bf16.mxu0 0
    %427 = vmatpush1.bf16.msra.mxu0 0
    %428 = vmatprep.subr.bf16.mxu0 0
    %429 = vmatpush1.bf16.msra.mxu0 0
    %430 = vmatprep.subr.bf16.mxu0 0
    %431 = vmatpush1.bf16.msra.mxu0 0
    %432 = vmatprep.mubr.bf16.mxu0 0
    %433 = vmatmul.mubr.bf16.gmra.mrb[0].mxu0 %v385
    %v434 = vpop.f32.mrb[0].mxu0
    %v435 = vadd.f32 0.0, %v434
    %v436 = vpop.f32.mrb[0].mxu0
    %v437 = vadd.f32 0.0, %v436
    %v438 = vpop.f32.mrb[0].mxu0
    %v439 = vpop.f32.mrb[0].mxu0
    %440 = vdwg.mxu0
    %441 = vmatprep.subr.bf16.mxu0 %v398
    %442 = vmatpush1.bf16.msra.mxu0 %v395
    %443 = vmatprep.subr.bf16.mxu0 0
    %444 = vmatpush1.bf16.msra.mxu0 0
    %445 = vmatprep.subr.bf16.mxu0 0
    %446 = vmatpush1.bf16.msra.mxu0 0
    %447 = vmatprep.subr.bf16.mxu0 0
    %448 = vmatpush1.bf16.msra.mxu0 0
    %449 = vmatprep.subr.bf16.mxu0 0
    %450 = vmatpush1.bf16.msra.mxu0 0
    %451 = vmatprep.subr.bf16.mxu0 0
    %452 = vmatpush1.bf16.msra.mxu0 0
    %453 = vmatprep.subr.bf16.mxu0 0
    %454 = vmatpush1.bf16.msra.mxu0 0
    %455 = vmatprep.subr.bf16.mxu0 0
    %456 = vmatpush1.bf16.msra.mxu0 0
    %457 = vmatprep.subr.bf16.mxu0 0
    %458 = vmatpush1.bf16.msra.mxu0 0
    %459 = vmatprep.subr.bf16.mxu0 0
    %460 = vmatpush1.bf16.msra.mxu0 0
    %461 = vmatprep.subr.bf16.mxu0 0
    %462 = vmatpush1.bf16.msra.mxu0 0
    %463 = vmatprep.subr.bf16.mxu0 0
    %464 = vmatpush1.bf16.msra.mxu0 0
    %465 = vmatprep.subr.bf16.mxu0 0
    %466 = vmatpush1.bf16.msra.mxu0 0
    %467 = vmatprep.subr.bf16.mxu0 0
    %468 = vmatpush1.bf16.msra.mxu0 0
    %469 = vmatprep.subr.bf16.mxu0 0
    %470 = vmatpush1.bf16.msra.mxu0 0
    %471 = vmatprep.subr.bf16.mxu0 0
    %472 = vmatpush1.bf16.msra.mxu0 0
    %473 = vmatprep.mubr.bf16.mxu0 0
    %474 = vmatmul.mubr.bf16.gmra.mrb[0].mxu0 %v385
    %v475 = vpop.f32.mrb[0].mxu0
    %v476 = vadd.f32 0.0, %v475
    %v477 = vpop.f32.mrb[0].mxu0
    %v478 = vadd.f32 0.0, %v477
    %v479 = vpop.f32.mrb[0].mxu0
    %v480 = vpop.f32.mrb[0].mxu0
    %481 = vdwg.mxu0
    %v483 = vsel %vm383, %v354, 0
    %v486 = vsel %vm387, %v350, 0
    %v489 = vsel %vm387, %v351, 0
    %v492 = vsel %vm387, %v352, 0
    %v495 = vsel %vm387, %v353, 0
    %497 = vmatprep.subr.bf16.mxu0 %v489
    %498 = vmatpush1.bf16.msra.mxu0 %v486
    %499 = vmatprep.subr.bf16.mxu0 0
    %500 = vmatpush1.bf16.msra.mxu0 0
    %501 = vmatprep.subr.bf16.mxu0 0
    %502 = vmatpush1.bf16.msra.mxu0 0
    %503 = vmatprep.subr.bf16.mxu0 0
    %504 = vmatpush1.bf16.msra.mxu0 0
    %505 = vmatprep.subr.bf16.mxu0 0
    %506 = vmatpush1.bf16.msra.mxu0 0
    %507 = vmatprep.subr.bf16.mxu0 0
    %508 = vmatpush1.bf16.msra.mxu0 0
    %509 = vmatprep.subr.bf16.mxu0 0
    %510 = vmatpush1.bf16.msra.mxu0 0
    %511 = vmatprep.subr.bf16.mxu0 0
    %512 = vmatpush1.bf16.msra.mxu0 0
    %513 = vmatprep.subr.bf16.mxu0 0
    %514 = vmatpush1.bf16.msra.mxu0 0
    %515 = vmatprep.subr.bf16.mxu0 0
    %516 = vmatpush1.bf16.msra.mxu0 0
    %517 = vmatprep.subr.bf16.mxu0 0
    %518 = vmatpush1.bf16.msra.mxu0 0
    %519 = vmatprep.subr.bf16.mxu0 0
    %520 = vmatpush1.bf16.msra.mxu0 0
    %521 = vmatprep.subr.bf16.mxu0 0
    %522 = vmatpush1.bf16.msra.mxu0 0
    %523 = vmatprep.subr.bf16.mxu0 0
    %524 = vmatpush1.bf16.msra.mxu0 0
    %525 = vmatprep.subr.bf16.mxu0 0
    %526 = vmatpush1.bf16.msra.mxu0 0
    %527 = vmatprep.subr.bf16.mxu0 0
    %528 = vmatpush1.bf16.msra.mxu0 0
    %529 = vmatprep.mubr.bf16.mxu0 0
    %530 = vmatmul.mubr.bf16.gmra.mrb[0].mxu0 %v483
    %v531 = vpop.f32.mrb[0].mxu0
    %v532 = vadd.f32 %v435, %v531
    %v533 = vpop.f32.mrb[0].mxu0
    %v534 = vadd.f32 %v437, %v533
    %v535 = vpop.f32.mrb[0].mxu0
    %v536 = vpop.f32.mrb[0].mxu0
    %537 = vdwg.mxu0
    %538 = vmatprep.subr.bf16.mxu0 %v495
    %539 = vmatpush1.bf16.msra.mxu0 %v492
    %540 = vmatprep.subr.bf16.mxu0 0
    %541 = vmatpush1.bf16.msra.mxu0 0
    %542 = vmatprep.subr.bf16.mxu0 0
    %543 = vmatpush1.bf16.msra.mxu0 0
    %544 = vmatprep.subr.bf16.mxu0 0
    %545 = vmatpush1.bf16.msra.mxu0 0
    %546 = vmatprep.subr.bf16.mxu0 0
    %547 = vmatpush1.bf16.msra.mxu0 0
    %548 = vmatprep.subr.bf16.mxu0 0
    %549 = vmatpush1.bf16.msra.mxu0 0
    %550 = vmatprep.subr.bf16.mxu0 0
    %551 = vmatpush1.bf16.msra.mxu0 0
    %552 = vmatprep.subr.bf16.mxu0 0
    %553 = vmatpush1.bf16.msra.mxu0 0
    %554 = vmatprep.subr.bf16.mxu0 0
    %555 = vmatpush1.bf16.msra.mxu0 0
    %556 = vmatprep.subr.bf16.mxu0 0
    %557 = vmatpush1.bf16.msra.mxu0 0
    %558 = vmatprep.subr.bf16.mxu0 0
    %559 = vmatpush1.bf16.msra.mxu0 0
    %560 = vmatprep.subr.bf16.mxu0 0
    %561 = vmatpush1.bf16.msra.mxu0 0
    %562 = vmatprep.subr.bf16.mxu0 0
    %563 = vmatpush1.bf16.msra.mxu0 0
    %564 = vmatprep.subr.bf16.mxu0 0
    %565 = vmatpush1.bf16.msra.mxu0 0
    %566 = vmatprep.subr.bf16.mxu0 0
    %567 = vmatpush1.bf16.msra.mxu0 0
    %568 = vmatprep.subr.bf16.mxu0 0
    %569 = vmatpush1.bf16.msra.mxu0 0
    %570 = vmatprep.mubr.bf16.mxu0 0
    %571 = vmatmul.mubr.bf16.gmra.mrb[0].mxu0 %v483
    %v572 = vpop.f32.mrb[0].mxu0
    %v573 = vadd.f32 %v476, %v572
    %v574 = vpop.f32.mrb[0].mxu0
    %v575 = vadd.f32 %v478, %v574
    %v576 = vpop.f32.mrb[0].mxu0
    %v577 = vpop.f32.mrb[0].mxu0
    %578 = vdwg.mxu0
    %579 = vrot.lane.b32.xlu0 %v324, 15
    %v580 = vpop.permute.xlu0 %579
    %581 = vrot.lane.b32.xlu0 %v325, 15
    %v582 = vpop.permute.xlu0 %581
    %583 = vrot.lane.b32.xlu0 %v326, 15
    %v584 = vpop.permute.xlu0 %583
    %585 = vrot.lane.b32.xlu0 %v327, 15
    %v586 = vpop.permute.xlu0 %585
    %vm587 = vcmp.lt.s32.totalorder %v223, 15
    %v588 = vsel %vm587, %v584, %v586
    %v589 = vsel %vm587, %v582, %v584
    %v590 = vsel %vm587, %v580, %v582
    %v591 = vsel %vm587, %v586, %v580
    %s592 = scalar_lea.vmem [#allocation5], 192
    %v593 = vld [vmem:[%s592] sm:$0xff]
    %v594 = vld [vmem:[%s592 + $0x8] sm:$0xff]
    %v595 = vld [vmem:[%s592 + $0x10] sm:$0xff]
    %v596 = vld [vmem:[%s592 + $0x18] sm:$0xff]
    %v597 = vmul.f32 %v591, %v593
    %v598 = vmul.f32 %v590, %v594
    %v599 = vmul.f32 %v589, %v595
    %v600 = vmul.f32 %v588, %v596
    %v601 = vpack.c.bf16 %v597, %v597
    %v602 = vpack.c.bf16 %v598, %v598
    %v603 = vpack.c.bf16 %v599, %v599
    %v604 = vpack.c.bf16 %v600, %v600
    %s605 = scalar_lea.vmem %s2, 8
    %v606 = vld [vmem:[%s605] sm:$0xf]
    %v608 = vsel %vm383, %v606, 0
    %v611 = vsel %vm387, %v601, 0
    %v614 = vsel %vm387, %v602, 0
    %v617 = vsel %vm387, %v603, 0
    %v620 = vsel %vm387, %v604, 0
    %622 = vmatprep.subr.bf16.mxu0 %v614
    %623 = vmatpush1.bf16.msra.mxu0 %v611
    %624 = vmatprep.subr.bf16.mxu0 0
    %625 = vmatpush1.bf16.msra.mxu0 0
    %626 = vmatprep.subr.bf16.mxu0 0
    %627 = vmatpush1.bf16.msra.mxu0 0
    %628 = vmatprep.subr.bf16.mxu0 0
    %629 = vmatpush1.bf16.msra.mxu0 0
    %630 = vmatprep.subr.bf16.mxu0 0
    %631 = vmatpush1.bf16.msra.mxu0 0
    %632 = vmatprep.subr.bf16.mxu0 0
    %633 = vmatpush1.bf16.msra.mxu0 0
    %634 = vmatprep.subr.bf16.mxu0 0
    %635 = vmatpush1.bf16.msra.mxu0 0
    %636 = vmatprep.subr.bf16.mxu0 0
    %637 = vmatpush1.bf16.msra.mxu0 0
    %638 = vmatprep.subr.bf16.mxu0 0
    %639 = vmatpush1.bf16.msra.mxu0 0
    %640 = vmatprep.subr.bf16.mxu0 0
    %641 = vmatpush1.bf16.msra.mxu0 0
    %642 = vmatprep.subr.bf16.mxu0 0
    %643 = vmatpush1.bf16.msra.mxu0 0
    %644 = vmatprep.subr.bf16.mxu0 0
    %645 = vmatpush1.bf16.msra.mxu0 0
    %646 = vmatprep.subr.bf16.mxu0 0
    %647 = vmatpush1.bf16.msra.mxu0 0
    %648 = vmatprep.subr.bf16.mxu0 0
    %649 = vmatpush1.bf16.msra.mxu0 0
    %650 = vmatprep.subr.bf16.mxu0 0
    %651 = vmatpush1.bf16.msra.mxu0 0
    %652 = vmatprep.subr.bf16.mxu0 0
    %653 = vmatpush1.bf16.msra.mxu0 0
    %654 = vmatprep.mubr.bf16.mxu0 0
    %655 = vmatmul.mubr.bf16.gmra.mrb[0].mxu0 %v608
    %v656 = vpop.f32.mrb[0].mxu0
    %v657 = vadd.f32 0.0, %v656
    %v658 = vpop.f32.mrb[0].mxu0
    %v659 = vadd.f32 0.0, %v658
    %v660 = vpop.f32.mrb[0].mxu0
    %v661 = vpop.f32.mrb[0].mxu0
    %662 = vdwg.mxu0
    %663 = vmatprep.subr.bf16.mxu0 %v620
    %664 = vmatpush1.bf16.msra.mxu0 %v617
    %665 = vmatprep.subr.bf16.mxu0 0
    %666 = vmatpush1.bf16.msra.mxu0 0
    %667 = vmatprep.subr.bf16.mxu0 0
    %668 = vmatpush1.bf16.msra.mxu0 0
    %669 = vmatprep.subr.bf16.mxu0 0
    %670 = vmatpush1.bf16.msra.mxu0 0
    %671 = vmatprep.subr.bf16.mxu0 0
    %672 = vmatpush1.bf16.msra.mxu0 0
    %673 = vmatprep.subr.bf16.mxu0 0
    %674 = vmatpush1.bf16.msra.mxu0 0
    %675 = vmatprep.subr.bf16.mxu0 0
    %676 = vmatpush1.bf16.msra.mxu0 0
    %677 = vmatprep.subr.bf16.mxu0 0
    %678 = vmatpush1.bf16.msra.mxu0 0
    %679 = vmatprep.subr.bf16.mxu0 0
    %680 = vmatpush1.bf16.msra.mxu0 0
    %681 = vmatprep.subr.bf16.mxu0 0
    %682 = vmatpush1.bf16.msra.mxu0 0
    %683 = vmatprep.subr.bf16.mxu0 0
    %684 = vmatpush1.bf16.msra.mxu0 0
    %685 = vmatprep.subr.bf16.mxu0 0
    %686 = vmatpush1.bf16.msra.mxu0 0
    %687 = vmatprep.subr.bf16.mxu0 0
    %688 = vmatpush1.bf16.msra.mxu0 0
    %689 = vmatprep.subr.bf16.mxu0 0
    %690 = vmatpush1.bf16.msra.mxu0 0
    %691 = vmatprep.subr.bf16.mxu0 0
    %692 = vmatpush1.bf16.msra.mxu0 0
    %693 = vmatprep.subr.bf16.mxu0 0
    %694 = vmatpush1.bf16.msra.mxu0 0
    %695 = vmatprep.mubr.bf16.mxu0 0
    %696 = vmatmul.mubr.bf16.gmra.mrb[0].mxu0 %v608
    %v697 = vpop.f32.mrb[0].mxu0
    %v698 = vadd.f32 0.0, %v697
    %v699 = vpop.f32.mrb[0].mxu0
    %v700 = vadd.f32 0.0, %v699
    %v701 = vpop.f32.mrb[0].mxu0
    %v702 = vpop.f32.mrb[0].mxu0
    %703 = vdwg.mxu0
    %v704 = vadd.f32 %v532, %v657
    %v705 = vadd.f32 %v534, %v659
    %v706 = vadd.f32 %v573, %v698
    %v707 = vadd.f32 %v575, %v700
    %708 = vrot.lane.b32.xlu0 %v324, 1
    %v709 = vpop.permute.xlu0 %708
    %710 = vrot.lane.b32.xlu0 %v325, 1
    %v711 = vpop.permute.xlu0 %710
    %712 = vrot.lane.b32.xlu0 %v326, 1
    %v713 = vpop.permute.xlu0 %712
    %714 = vrot.lane.b32.xlu0 %v327, 1
    %v715 = vpop.permute.xlu0 %714
    %v716 = vsel %vm224, %v713, %v715
    %v717 = vsel %vm224, %v711, %v713
    %v718 = vsel %vm224, %v709, %v711
    %v719 = vsel %vm224, %v715, %v709
    %s720 = scalar_lea.vmem [#allocation5], 224
    %v721 = vld [vmem:[%s720] sm:$0xff]
    %v722 = vld [vmem:[%s720 + $0x8] sm:$0xff]
    %v723 = vld [vmem:[%s720 + $0x10] sm:$0xff]
    %v724 = vld [vmem:[%s720 + $0x18] sm:$0xff]
    %v725 = vmul.f32 %v719, %v721
    %v726 = vmul.f32 %v718, %v722
    %v727 = vmul.f32 %v717, %v723
    %v728 = vmul.f32 %v716, %v724
    %v729 = vpack.c.bf16 %v725, %v725
    %v730 = vpack.c.bf16 %v726, %v726
    %v731 = vpack.c.bf16 %v727, %v727
    %v732 = vpack.c.bf16 %v728, %v728
    %s733 = scalar_lea.vmem %s2, 12
    %v734 = vld [vmem:[%s733] sm:$0xf]
    %v736 = vsel %vm383, %v734, 0
    %v739 = vsel %vm387, %v729, 0
    %v742 = vsel %vm387, %v730, 0
    %v745 = vsel %vm387, %v731, 0
    %v748 = vsel %vm387, %v732, 0
    %750 = vmatprep.subr.bf16.mxu0 %v742
    %751 = vmatpush1.bf16.msra.mxu0 %v739
    %752 = vmatprep.subr.bf16.mxu0 0
    %753 = vmatpush1.bf16.msra.mxu0 0
    %754 = vmatprep.subr.bf16.mxu0 0
    %755 = vmatpush1.bf16.msra.mxu0 0
    %756 = vmatprep.subr.bf16.mxu0 0
    %757 = vmatpush1.bf16.msra.mxu0 0
    %758 = vmatprep.subr.bf16.mxu0 0
    %759 = vmatpush1.bf16.msra.mxu0 0
    %760 = vmatprep.subr.bf16.mxu0 0
    %761 = vmatpush1.bf16.msra.mxu0 0
    %762 = vmatprep.subr.bf16.mxu0 0
    %763 = vmatpush1.bf16.msra.mxu0 0
    %764 = vmatprep.subr.bf16.mxu0 0
    %765 = vmatpush1.bf16.msra.mxu0 0
    %766 = vmatprep.subr.bf16.mxu0 0
    %767 = vmatpush1.bf16.msra.mxu0 0
    %768 = vmatprep.subr.bf16.mxu0 0
    %769 = vmatpush1.bf16.msra.mxu0 0
    %770 = vmatprep.subr.bf16.mxu0 0
    %771 = vmatpush1.bf16.msra.mxu0 0
    %772 = vmatprep.subr.bf16.mxu0 0
    %773 = vmatpush1.bf16.msra.mxu0 0
    %774 = vmatprep.subr.bf16.mxu0 0
    %775 = vmatpush1.bf16.msra.mxu0 0
    %776 = vmatprep.subr.bf16.mxu0 0
    %777 = vmatpush1.bf16.msra.mxu0 0
    %778 = vmatprep.subr.bf16.mxu0 0
    %779 = vmatpush1.bf16.msra.mxu0 0
    %780 = vmatprep.subr.bf16.mxu0 0
    %781 = vmatpush1.bf16.msra.mxu0 0
    %782 = vmatprep.mubr.bf16.mxu0 0
    %783 = vmatmul.mubr.bf16.gmra.mrb[0].mxu0 %v736
    %v784 = vpop.f32.mrb[0].mxu0
    %v785 = vadd.f32 0.0, %v784
    %v786 = vpop.f32.mrb[0].mxu0
    %v787 = vadd.f32 0.0, %v786
    %v788 = vpop.f32.mrb[0].mxu0
    %v789 = vpop.f32.mrb[0].mxu0
    %790 = vdwg.mxu0
    %791 = vmatprep.subr.bf16.mxu0 %v748
    %792 = vmatpush1.bf16.msra.mxu0 %v745
    %793 = vmatprep.subr.bf16.mxu0 0
    %794 = vmatpush1.bf16.msra.mxu0 0
    %795 = vmatprep.subr.bf16.mxu0 0
    %796 = vmatpush1.bf16.msra.mxu0 0
    %797 = vmatprep.subr.bf16.mxu0 0
    %798 = vmatpush1.bf16.msra.mxu0 0
    %799 = vmatprep.subr.bf16.mxu0 0
    %800 = vmatpush1.bf16.msra.mxu0 0
    %801 = vmatprep.subr.bf16.mxu0 0
    %802 = vmatpush1.bf16.msra.mxu0 0
    %803 = vmatprep.subr.bf16.mxu0 0
    %804 = vmatpush1.bf16.msra.mxu0 0
    %805 = vmatprep.subr.bf16.mxu0 0
    %806 = vmatpush1.bf16.msra.mxu0 0
    %807 = vmatprep.subr.bf16.mxu0 0
    %808 = vmatpush1.bf16.msra.mxu0 0
    %809 = vmatprep.subr.bf16.mxu0 0
    %810 = vmatpush1.bf16.msra.mxu0 0
    %811 = vmatprep.subr.bf16.mxu0 0
    %812 = vmatpush1.bf16.msra.mxu0 0
    %813 = vmatprep.subr.bf16.mxu0 0
    %814 = vmatpush1.bf16.msra.mxu0 0
    %815 = vmatprep.subr.bf16.mxu0 0
    %816 = vmatpush1.bf16.msra.mxu0 0
    %817 = vmatprep.subr.bf16.mxu0 0
    %818 = vmatpush1.bf16.msra.mxu0 0
    %819 = vmatprep.subr.bf16.mxu0 0
    %820 = vmatpush1.bf16.msra.mxu0 0
    %821 = vmatprep.subr.bf16.mxu0 0
    %822 = vmatpush1.bf16.msra.mxu0 0
    %823 = vmatprep.mubr.bf16.mxu0 0
    %824 = vmatmul.mubr.bf16.gmra.mrb[0].mxu0 %v736
    %v825 = vpop.f32.mrb[0].mxu0
    %v826 = vadd.f32 0.0, %v825
    %v827 = vpop.f32.mrb[0].mxu0
    %v828 = vadd.f32 0.0, %v827
    %v829 = vpop.f32.mrb[0].mxu0
    %v830 = vpop.f32.mrb[0].mxu0
    %831 = vdwg.mxu0
    %v832 = vadd.f32 %v704, %v785
    %v833 = vadd.f32 %v705, %v787
    %v834 = vadd.f32 %v706, %v826
    %v835 = vadd.f32 %v707, %v828
    %s836 = scalar_lea.vmem [#allocation5], 256
    %v837 = vld [vmem:[%s836] sm:$0xff]
    %v838 = vld [vmem:[%s836 + $0x8] sm:$0xff]
    %v839 = vld [vmem:[%s836 + $0x10] sm:$0xff]
    %v840 = vld [vmem:[%s836 + $0x18] sm:$0xff]
    %v841 = vmul.f32 %v324, %v837
    %v842 = vmul.f32 %v325, %v838
    %v843 = vmul.f32 %v326, %v839
    %v844 = vmul.f32 %v327, %v840
    %v845 = vpack.c.bf16 %v841, %v841
    %v846 = vpack.c.bf16 %v842, %v842
    %v847 = vpack.c.bf16 %v843, %v843
    %v848 = vpack.c.bf16 %v844, %v844
    %s849 = scalar_lea.vmem %s2, 16
    %v850 = vld [vmem:[%s849] sm:$0xf]
    %v852 = vsel %vm383, %v850, 0
    %v855 = vsel %vm387, %v845, 0
    %v858 = vsel %vm387, %v846, 0
    %v861 = vsel %vm387, %v847, 0
    %v864 = vsel %vm387, %v848, 0
    %866 = vmatprep.subr.bf16.mxu0 %v858
    %867 = vmatpush1.bf16.msra.mxu0 %v855
    %868 = vmatprep.subr.bf16.mxu0 0
    %869 = vmatpush1.bf16.msra.mxu0 0
    %870 = vmatprep.subr.bf16.mxu0 0
    %871 = vmatpush1.bf16.msra.mxu0 0
    %872 = vmatprep.subr.bf16.mxu0 0
    %873 = vmatpush1.bf16.msra.mxu0 0
    %874 = vmatprep.subr.bf16.mxu0 0
    %875 = vmatpush1.bf16.msra.mxu0 0
    %876 = vmatprep.subr.bf16.mxu0 0
    %877 = vmatpush1.bf16.msra.mxu0 0
    %878 = vmatprep.subr.bf16.mxu0 0
    %879 = vmatpush1.bf16.msra.mxu0 0
    %880 = vmatprep.subr.bf16.mxu0 0
    %881 = vmatpush1.bf16.msra.mxu0 0
    %882 = vmatprep.subr.bf16.mxu0 0
    %883 = vmatpush1.bf16.msra.mxu0 0
    %884 = vmatprep.subr.bf16.mxu0 0
    %885 = vmatpush1.bf16.msra.mxu0 0
    %886 = vmatprep.subr.bf16.mxu0 0
    %887 = vmatpush1.bf16.msra.mxu0 0
    %888 = vmatprep.subr.bf16.mxu0 0
    %889 = vmatpush1.bf16.msra.mxu0 0
    %890 = vmatprep.subr.bf16.mxu0 0
    %891 = vmatpush1.bf16.msra.mxu0 0
    %892 = vmatprep.subr.bf16.mxu0 0
    %893 = vmatpush1.bf16.msra.mxu0 0
    %894 = vmatprep.subr.bf16.mxu0 0
    %895 = vmatpush1.bf16.msra.mxu0 0
    %896 = vmatprep.subr.bf16.mxu0 0
    %897 = vmatpush1.bf16.msra.mxu0 0
    %898 = vmatprep.mubr.bf16.mxu0 0
    %899 = vmatmul.mubr.bf16.gmra.mrb[0].mxu0 %v852
    %v900 = vpop.f32.mrb[0].mxu0
    %v901 = vadd.f32 0.0, %v900
    %v902 = vpop.f32.mrb[0].mxu0
    %v903 = vadd.f32 0.0, %v902
    %v904 = vpop.f32.mrb[0].mxu0
    %v905 = vpop.f32.mrb[0].mxu0
    %906 = vdwg.mxu0
    %907 = vmatprep.subr.bf16.mxu0 %v864
    %908 = vmatpush1.bf16.msra.mxu0 %v861
    %909 = vmatprep.subr.bf16.mxu0 0
    %910 = vmatpush1.bf16.msra.mxu0 0
    %911 = vmatprep.subr.bf16.mxu0 0
    %912 = vmatpush1.bf16.msra.mxu0 0
    %913 = vmatprep.subr.bf16.mxu0 0
    %914 = vmatpush1.bf16.msra.mxu0 0
    %915 = vmatprep.subr.bf16.mxu0 0
    %916 = vmatpush1.bf16.msra.mxu0 0
    %917 = vmatprep.subr.bf16.mxu0 0
    %918 = vmatpush1.bf16.msra.mxu0 0
    %919 = vmatprep.subr.bf16.mxu0 0
    %920 = vmatpush1.bf16.msra.mxu0 0
    %921 = vmatprep.subr.bf16.mxu0 0
    %922 = vmatpush1.bf16.msra.mxu0 0
    %923 = vmatprep.subr.bf16.mxu0 0
    %924 = vmatpush1.bf16.msra.mxu0 0
    %925 = vmatprep.subr.bf16.mxu0 0
    %926 = vmatpush1.bf16.msra.mxu0 0
    %927 = vmatprep.subr.bf16.mxu0 0
    %928 = vmatpush1.bf16.msra.mxu0 0
    %929 = vmatprep.subr.bf16.mxu0 0
    %930 = vmatpush1.bf16.msra.mxu0 0
    %931 = vmatprep.subr.bf16.mxu0 0
    %932 = vmatpush1.bf16.msra.mxu0 0
    %933 = vmatprep.subr.bf16.mxu0 0
    %934 = vmatpush1.bf16.msra.mxu0 0
    %935 = vmatprep.subr.bf16.mxu0 0
    %936 = vmatpush1.bf16.msra.mxu0 0
    %937 = vmatprep.subr.bf16.mxu0 0
    %938 = vmatpush1.bf16.msra.mxu0 0
    %939 = vmatprep.mubr.bf16.mxu0 0
    %940 = vmatmul.mubr.bf16.gmra.mrb[0].mxu0 %v852
    %v941 = vpop.f32.mrb[0].mxu0
    %v942 = vadd.f32 0.0, %v941
    %v943 = vpop.f32.mrb[0].mxu0
    %v944 = vadd.f32 0.0, %v943
    %v945 = vpop.f32.mrb[0].mxu0
    %v946 = vpop.f32.mrb[0].mxu0
    %947 = vdwg.mxu0
    %v948 = vadd.f32 %v832, %v901
    %v949 = vadd.f32 %v833, %v903
    %v950 = vadd.f32 %v834, %v942
    %v951 = vadd.f32 %v835, %v944
    %952 = vrot.lane.b32.xlu0 %v324, 127
    %v953 = vpop.permute.xlu0 %952
    %954 = vrot.lane.b32.xlu0 %v325, 127
    %v955 = vpop.permute.xlu0 %954
    %956 = vrot.lane.b32.xlu0 %v326, 127
    %v957 = vpop.permute.xlu0 %956
    %958 = vrot.lane.b32.xlu0 %v327, 127
    %v959 = vpop.permute.xlu0 %958
    %vm960 = vcmp.lt.s32.totalorder %v223, 127
    %v961 = vsel %vm960, %v957, %v959
    %v962 = vsel %vm960, %v955, %v957
    %v963 = vsel %vm960, %v953, %v955
    %v964 = vsel %vm960, %v959, %v953
    %s965 = scalar_lea.vmem [#allocation5], 288
    %v966 = vld [vmem:[%s965] sm:$0xff]
    %v967 = vld [vmem:[%s965 + $0x8] sm:$0xff]
    %v968 = vld [vmem:[%s965 + $0x10] sm:$0xff]
    %v969 = vld [vmem:[%s965 + $0x18] sm:$0xff]
    %v970 = vmul.f32 %v963, %v966
    %v971 = vmul.f32 %v962, %v967
    %v972 = vmul.f32 %v961, %v968
    %v973 = vmul.f32 %v964, %v969
    %v974 = vpack.c.bf16 %v970, %v970
    %v975 = vpack.c.bf16 %v971, %v971
    %v976 = vpack.c.bf16 %v972, %v972
    %v977 = vpack.c.bf16 %v973, %v973
    %s978 = scalar_lea.vmem %s2, 20
    %v979 = vld [vmem:[%s978] sm:$0xf]
    %v981 = vsel %vm383, %v979, 0
    %v984 = vsel %vm387, %v974, 0
    %v987 = vsel %vm387, %v975, 0
    %v990 = vsel %vm387, %v976, 0
    %v993 = vsel %vm387, %v977, 0
    %995 = vmatprep.subr.bf16.mxu0 %v987
    %996 = vmatpush1.bf16.msra.mxu0 %v984
    %997 = vmatprep.subr.bf16.mxu0 0
    %998 = vmatpush1.bf16.msra.mxu0 0
    %999 = vmatprep.subr.bf16.mxu0 0
    %1000 = vmatpush1.bf16.msra.mxu0 0
    %1001 = vmatprep.subr.bf16.mxu0 0
    %1002 = vmatpush1.bf16.msra.mxu0 0
    %1003 = vmatprep.subr.bf16.mxu0 0
    %1004 = vmatpush1.bf16.msra.mxu0 0
    %1005 = vmatprep.subr.bf16.mxu0 0
    %1006 = vmatpush1.bf16.msra.mxu0 0
    %1007 = vmatprep.subr.bf16.mxu0 0
    %1008 = vmatpush1.bf16.msra.mxu0 0
    %1009 = vmatprep.subr.bf16.mxu0 0
    %1010 = vmatpush1.bf16.msra.mxu0 0
    %1011 = vmatprep.subr.bf16.mxu0 0
    %1012 = vmatpush1.bf16.msra.mxu0 0
    %1013 = vmatprep.subr.bf16.mxu0 0
    %1014 = vmatpush1.bf16.msra.mxu0 0
    %1015 = vmatprep.subr.bf16.mxu0 0
    %1016 = vmatpush1.bf16.msra.mxu0 0
    %1017 = vmatprep.subr.bf16.mxu0 0
    %1018 = vmatpush1.bf16.msra.mxu0 0
    %1019 = vmatprep.subr.bf16.mxu0 0
    %1020 = vmatpush1.bf16.msra.mxu0 0
    %1021 = vmatprep.subr.bf16.mxu0 0
    %1022 = vmatpush1.bf16.msra.mxu0 0
    %1023 = vmatprep.subr.bf16.mxu0 0
    %1024 = vmatpush1.bf16.msra.mxu0 0
    %1025 = vmatprep.subr.bf16.mxu0 0
    %1026 = vmatpush1.bf16.msra.mxu0 0
    %1027 = vmatprep.mubr.bf16.mxu0 0
    %1028 = vmatmul.mubr.bf16.gmra.mrb[0].mxu0 %v981
    %v1029 = vpop.f32.mrb[0].mxu0
    %v1030 = vadd.f32 0.0, %v1029
    %v1031 = vpop.f32.mrb[0].mxu0
    %v1032 = vadd.f32 0.0, %v1031
    %v1033 = vpop.f32.mrb[0].mxu0
    %v1034 = vpop.f32.mrb[0].mxu0
    %1035 = vdwg.mxu0
    %1036 = vmatprep.subr.bf16.mxu0 %v993
    %1037 = vmatpush1.bf16.msra.mxu0 %v990
    %1038 = vmatprep.subr.bf16.mxu0 0
    %1039 = vmatpush1.bf16.msra.mxu0 0
    %1040 = vmatprep.subr.bf16.mxu0 0
    %1041 = vmatpush1.bf16.msra.mxu0 0
    %1042 = vmatprep.subr.bf16.mxu0 0
    %1043 = vmatpush1.bf16.msra.mxu0 0
    %1044 = vmatprep.subr.bf16.mxu0 0
    %1045 = vmatpush1.bf16.msra.mxu0 0
    %1046 = vmatprep.subr.bf16.mxu0 0
    %1047 = vmatpush1.bf16.msra.mxu0 0
    %1048 = vmatprep.subr.bf16.mxu0 0
    %1049 = vmatpush1.bf16.msra.mxu0 0
    %1050 = vmatprep.subr.bf16.mxu0 0
    %1051 = vmatpush1.bf16.msra.mxu0 0
    %1052 = vmatprep.subr.bf16.mxu0 0
    %1053 = vmatpush1.bf16.msra.mxu0 0
    %1054 = vmatprep.subr.bf16.mxu0 0
    %1055 = vmatpush1.bf16.msra.mxu0 0
    %1056 = vmatprep.subr.bf16.mxu0 0
    %1057 = vmatpush1.bf16.msra.mxu0 0
    %1058 = vmatprep.subr.bf16.mxu0 0
    %1059 = vmatpush1.bf16.msra.mxu0 0
    %1060 = vmatprep.subr.bf16.mxu0 0
    %1061 = vmatpush1.bf16.msra.mxu0 0
    %1062 = vmatprep.subr.bf16.mxu0 0
    %1063 = vmatpush1.bf16.msra.mxu0 0
    %1064 = vmatprep.subr.bf16.mxu0 0
    %1065 = vmatpush1.bf16.msra.mxu0 0
    %1066 = vmatprep.subr.bf16.mxu0 0
    %1067 = vmatpush1.bf16.msra.mxu0 0
    %1068 = vmatprep.mubr.bf16.mxu0 0
    %1069 = vmatmul.mubr.bf16.gmra.mrb[0].mxu0 %v981
    %v1070 = vpop.f32.mrb[0].mxu0
    %v1071 = vadd.f32 0.0, %v1070
    %v1072 = vpop.f32.mrb[0].mxu0
    %v1073 = vadd.f32 0.0, %v1072
    %v1074 = vpop.f32.mrb[0].mxu0
    %v1075 = vpop.f32.mrb[0].mxu0
    %1076 = vdwg.mxu0
    %v1077 = vadd.f32 %v948, %v1030
    %v1078 = vadd.f32 %v949, %v1032
    %v1079 = vadd.f32 %v950, %v1071
    %v1080 = vadd.f32 %v951, %v1073
    %1081 = vrot.lane.b32.xlu0 %v324, 113
    %v1082 = vpop.permute.xlu0 %1081
    %1083 = vrot.lane.b32.xlu0 %v325, 113
    %v1084 = vpop.permute.xlu0 %1083
    %1085 = vrot.lane.b32.xlu0 %v326, 113
    %v1086 = vpop.permute.xlu0 %1085
    %1087 = vrot.lane.b32.xlu0 %v327, 113
    %v1088 = vpop.permute.xlu0 %1087
    %vm1089 = vcmp.lt.s32.totalorder %v223, 113
    %v1090 = vsel %vm1089, %v1086, %v1088
    %v1091 = vsel %vm1089, %v1084, %v1086
    %v1092 = vsel %vm1089, %v1082, %v1084
    %v1093 = vsel %vm1089, %v1088, %v1082
    %s1094 = scalar_lea.vmem [#allocation5], 320
    %v1095 = vld [vmem:[%s1094] sm:$0xff]
    %v1096 = vld [vmem:[%s1094 + $0x8] sm:$0xff]
    %v1097 = vld [vmem:[%s1094 + $0x10] sm:$0xff]
    %v1098 = vld [vmem:[%s1094 + $0x18] sm:$0xff]
    %v1099 = vmul.f32 %v1092, %v1095
    %v1100 = vmul.f32 %v1091, %v1096
    %v1101 = vmul.f32 %v1090, %v1097
    %v1102 = vmul.f32 %v1093, %v1098
    %v1103 = vpack.c.bf16 %v1099, %v1099
    %v1104 = vpack.c.bf16 %v1100, %v1100
    %v1105 = vpack.c.bf16 %v1101, %v1101
    %v1106 = vpack.c.bf16 %v1102, %v1102
    %s1107 = scalar_lea.vmem %s2, 24
    %v1108 = vld [vmem:[%s1107] sm:$0xf]
    %v1110 = vsel %vm383, %v1108, 0
    %v1113 = vsel %vm387, %v1103, 0
    %v1116 = vsel %vm387, %v1104, 0
    %v1119 = vsel %vm387, %v1105, 0
    %v1122 = vsel %vm387, %v1106, 0
    %1124 = vmatprep.subr.bf16.mxu0 %v1116
    %1125 = vmatpush1.bf16.msra.mxu0 %v1113
    %1126 = vmatprep.subr.bf16.mxu0 0
    %1127 = vmatpush1.bf16.msra.mxu0 0
    %1128 = vmatprep.subr.bf16.mxu0 0
    %1129 = vmatpush1.bf16.msra.mxu0 0
    %1130 = vmatprep.subr.bf16.mxu0 0
    %1131 = vmatpush1.bf16.msra.mxu0 0
    %1132 = vmatprep.subr.bf16.mxu0 0
    %1133 = vmatpush1.bf16.msra.mxu0 0
    %1134 = vmatprep.subr.bf16.mxu0 0
    %1135 = vmatpush1.bf16.msra.mxu0 0
    %1136 = vmatprep.subr.bf16.mxu0 0
    %1137 = vmatpush1.bf16.msra.mxu0 0
    %1138 = vmatprep.subr.bf16.mxu0 0
    %1139 = vmatpush1.bf16.msra.mxu0 0
    %1140 = vmatprep.subr.bf16.mxu0 0
    %1141 = vmatpush1.bf16.msra.mxu0 0
    %1142 = vmatprep.subr.bf16.mxu0 0
    %1143 = vmatpush1.bf16.msra.mxu0 0
    %1144 = vmatprep.subr.bf16.mxu0 0
    %1145 = vmatpush1.bf16.msra.mxu0 0
    %1146 = vmatprep.subr.bf16.mxu0 0
    %1147 = vmatpush1.bf16.msra.mxu0 0
    %1148 = vmatprep.subr.bf16.mxu0 0
    %1149 = vmatpush1.bf16.msra.mxu0 0
    %1150 = vmatprep.subr.bf16.mxu0 0
    %1151 = vmatpush1.bf16.msra.mxu0 0
    %1152 = vmatprep.subr.bf16.mxu0 0
    %1153 = vmatpush1.bf16.msra.mxu0 0
    %1154 = vmatprep.subr.bf16.mxu0 0
    %1155 = vmatpush1.bf16.msra.mxu0 0
    %1156 = vmatprep.mubr.bf16.mxu0 0
    %1157 = vmatmul.mubr.bf16.gmra.mrb[0].mxu0 %v1110
    %v1158 = vpop.f32.mrb[0].mxu0
    %v1159 = vadd.f32 0.0, %v1158
    %v1160 = vpop.f32.mrb[0].mxu0
    %v1161 = vadd.f32 0.0, %v1160
    %v1162 = vpop.f32.mrb[0].mxu0
    %v1163 = vpop.f32.mrb[0].mxu0
    %1164 = vdwg.mxu0
    %1165 = vmatprep.subr.bf16.mxu0 %v1122
    %1166 = vmatpush1.bf16.msra.mxu0 %v1119
    %1167 = vmatprep.subr.bf16.mxu0 0
    %1168 = vmatpush1.bf16.msra.mxu0 0
    %1169 = vmatprep.subr.bf16.mxu0 0
    %1170 = vmatpush1.bf16.msra.mxu0 0
    %1171 = vmatprep.subr.bf16.mxu0 0
    %1172 = vmatpush1.bf16.msra.mxu0 0
    %1173 = vmatprep.subr.bf16.mxu0 0
    %1174 = vmatpush1.bf16.msra.mxu0 0
    %1175 = vmatprep.subr.bf16.mxu0 0
    %1176 = vmatpush1.bf16.msra.mxu0 0
    %1177 = vmatprep.subr.bf16.mxu0 0
    %1178 = vmatpush1.bf16.msra.mxu0 0
    %1179 = vmatprep.subr.bf16.mxu0 0
    %1180 = vmatpush1.bf16.msra.mxu0 0
    %1181 = vmatprep.subr.bf16.mxu0 0
    %1182 = vmatpush1.bf16.msra.mxu0 0
    %1183 = vmatprep.subr.bf16.mxu0 0
    %1184 = vmatpush1.bf16.msra.mxu0 0
    %1185 = vmatprep.subr.bf16.mxu0 0
    %1186 = vmatpush1.bf16.msra.mxu0 0
    %1187 = vmatprep.subr.bf16.mxu0 0
    %1188 = vmatpush1.bf16.msra.mxu0 0
    %1189 = vmatprep.subr.bf16.mxu0 0
    %1190 = vmatpush1.bf16.msra.mxu0 0
    %1191 = vmatprep.subr.bf16.mxu0 0
    %1192 = vmatpush1.bf16.msra.mxu0 0
    %1193 = vmatprep.subr.bf16.mxu0 0
    %1194 = vmatpush1.bf16.msra.mxu0 0
    %1195 = vmatprep.subr.bf16.mxu0 0
    %1196 = vmatpush1.bf16.msra.mxu0 0
    %1197 = vmatprep.mubr.bf16.mxu0 0
    %1198 = vmatmul.mubr.bf16.gmra.mrb[0].mxu0 %v1110
    %v1199 = vpop.f32.mrb[0].mxu0
    %v1200 = vadd.f32 0.0, %v1199
    %v1201 = vpop.f32.mrb[0].mxu0
    %v1202 = vadd.f32 0.0, %v1201
    %v1203 = vpop.f32.mrb[0].mxu0
    %v1204 = vpop.f32.mrb[0].mxu0
    %1205 = vdwg.mxu0
    %v1206 = vadd.f32 %v1077, %v1159
    %v1207 = vadd.f32 %v1078, %v1161
    %v1208 = vadd.f32 %v1079, %v1200
    %v1209 = vadd.f32 %v1080, %v1202
    %1210 = vrot.lane.b32.xlu0 %v324, 112
    %v1211 = vpop.permute.xlu0 %1210
    %1212 = vrot.lane.b32.xlu0 %v325, 112
    %v1213 = vpop.permute.xlu0 %1212
    %1214 = vrot.lane.b32.xlu0 %v326, 112
    %v1215 = vpop.permute.xlu0 %1214
    %1216 = vrot.lane.b32.xlu0 %v327, 112
    %v1217 = vpop.permute.xlu0 %1216
    %vm1218 = vcmp.lt.s32.totalorder %v223, 112
    %v1219 = vsel %vm1218, %v1215, %v1217
    %v1220 = vsel %vm1218, %v1213, %v1215
    %v1221 = vsel %vm1218, %v1211, %v1213
    %v1222 = vsel %vm1218, %v1217, %v1211
    %s1223 = scalar_lea.vmem [#allocation5], 352
    %v1224 = vld [vmem:[%s1223] sm:$0xff]
    %v1225 = vld [vmem:[%s1223 + $0x8] sm:$0xff]
    %v1226 = vld [vmem:[%s1223 + $0x10] sm:$0xff]
    %v1227 = vld [vmem:[%s1223 + $0x18] sm:$0xff]
    %v1228 = vmul.f32 %v1221, %v1224
    %v1229 = vmul.f32 %v1220, %v1225
    %v1230 = vmul.f32 %v1219, %v1226
    %v1231 = vmul.f32 %v1222, %v1227
    %v1232 = vpack.c.bf16 %v1228, %v1228
    %v1233 = vpack.c.bf16 %v1229, %v1229
    %v1234 = vpack.c.bf16 %v1230, %v1230
    %v1235 = vpack.c.bf16 %v1231, %v1231
    %s1236 = scalar_lea.vmem %s2, 28
    %v1237 = vld [vmem:[%s1236] sm:$0xf]
    %v1239 = vsel %vm383, %v1237, 0
    %v1242 = vsel %vm387, %v1232, 0
    %v1245 = vsel %vm387, %v1233, 0
    %v1248 = vsel %vm387, %v1234, 0
    %v1251 = vsel %vm387, %v1235, 0
    %1253 = vmatprep.subr.bf16.mxu0 %v1245
    %1254 = vmatpush1.bf16.msra.mxu0 %v1242
    %1255 = vmatprep.subr.bf16.mxu0 0
    %1256 = vmatpush1.bf16.msra.mxu0 0
    %1257 = vmatprep.subr.bf16.mxu0 0
    %1258 = vmatpush1.bf16.msra.mxu0 0
    %1259 = vmatprep.subr.bf16.mxu0 0
    %1260 = vmatpush1.bf16.msra.mxu0 0
    %1261 = vmatprep.subr.bf16.mxu0 0
    %1262 = vmatpush1.bf16.msra.mxu0 0
    %1263 = vmatprep.subr.bf16.mxu0 0
    %1264 = vmatpush1.bf16.msra.mxu0 0
    %1265 = vmatprep.subr.bf16.mxu0 0
    %1266 = vmatpush1.bf16.msra.mxu0 0
    %1267 = vmatprep.subr.bf16.mxu0 0
    %1268 = vmatpush1.bf16.msra.mxu0 0
    %1269 = vmatprep.subr.bf16.mxu0 0
    %1270 = vmatpush1.bf16.msra.mxu0 0
    %1271 = vmatprep.subr.bf16.mxu0 0
    %1272 = vmatpush1.bf16.msra.mxu0 0
    %1273 = vmatprep.subr.bf16.mxu0 0
    %1274 = vmatpush1.bf16.msra.mxu0 0
    %1275 = vmatprep.subr.bf16.mxu0 0
    %1276 = vmatpush1.bf16.msra.mxu0 0
    %1277 = vmatprep.subr.bf16.mxu0 0
    %1278 = vmatpush1.bf16.msra.mxu0 0
    %1279 = vmatprep.subr.bf16.mxu0 0
    %1280 = vmatpush1.bf16.msra.mxu0 0
    %1281 = vmatprep.subr.bf16.mxu0 0
    %1282 = vmatpush1.bf16.msra.mxu0 0
    %1283 = vmatprep.subr.bf16.mxu0 0
    %1284 = vmatpush1.bf16.msra.mxu0 0
    %1285 = vmatprep.mubr.bf16.mxu0 0
    %1286 = vmatmul.mubr.bf16.gmra.mrb[0].mxu0 %v1239
    %v1287 = vpop.f32.mrb[0].mxu0
    %v1288 = vadd.f32 0.0, %v1287
    %v1289 = vpop.f32.mrb[0].mxu0
    %v1290 = vadd.f32 0.0, %v1289
    %v1291 = vpop.f32.mrb[0].mxu0
    %v1292 = vpop.f32.mrb[0].mxu0
    %1293 = vdwg.mxu0
    %1294 = vmatprep.subr.bf16.mxu0 %v1251
    %1295 = vmatpush1.bf16.msra.mxu0 %v1248
    %1296 = vmatprep.subr.bf16.mxu0 0
    %1297 = vmatpush1.bf16.msra.mxu0 0
    %1298 = vmatprep.subr.bf16.mxu0 0
    %1299 = vmatpush1.bf16.msra.mxu0 0
    %1300 = vmatprep.subr.bf16.mxu0 0
    %1301 = vmatpush1.bf16.msra.mxu0 0
    %1302 = vmatprep.subr.bf16.mxu0 0
    %1303 = vmatpush1.bf16.msra.mxu0 0
    %1304 = vmatprep.subr.bf16.mxu0 0
    %1305 = vmatpush1.bf16.msra.mxu0 0
    %1306 = vmatprep.subr.bf16.mxu0 0
    %1307 = vmatpush1.bf16.msra.mxu0 0
    %1308 = vmatprep.subr.bf16.mxu0 0
    %1309 = vmatpush1.bf16.msra.mxu0 0
    %1310 = vmatprep.subr.bf16.mxu0 0
    %1311 = vmatpush1.bf16.msra.mxu0 0
    %1312 = vmatprep.subr.bf16.mxu0 0
    %1313 = vmatpush1.bf16.msra.mxu0 0
    %1314 = vmatprep.subr.bf16.mxu0 0
    %1315 = vmatpush1.bf16.msra.mxu0 0
    %1316 = vmatprep.subr.bf16.mxu0 0
    %1317 = vmatpush1.bf16.msra.mxu0 0
    %1318 = vmatprep.subr.bf16.mxu0 0
    %1319 = vmatpush1.bf16.msra.mxu0 0
    %1320 = vmatprep.subr.bf16.mxu0 0
    %1321 = vmatpush1.bf16.msra.mxu0 0
    %1322 = vmatprep.subr.bf16.mxu0 0
    %1323 = vmatpush1.bf16.msra.mxu0 0
    %1324 = vmatprep.subr.bf16.mxu0 0
    %1325 = vmatpush1.bf16.msra.mxu0 0
    %1326 = vmatprep.mubr.bf16.mxu0 0
    %1327 = vmatmul.mubr.bf16.gmra.mrb[0].mxu0 %v1239
    %v1328 = vpop.f32.mrb[0].mxu0
    %v1329 = vadd.f32 0.0, %v1328
    %v1330 = vpop.f32.mrb[0].mxu0
    %v1331 = vadd.f32 0.0, %v1330
    %v1332 = vpop.f32.mrb[0].mxu0
    %v1333 = vpop.f32.mrb[0].mxu0
    %1334 = vdwg.mxu0
    %v1335 = vadd.f32 %v1206, %v1288
    %v1336 = vadd.f32 %v1207, %v1290
    %v1337 = vadd.f32 %v1208, %v1329
    %v1338 = vadd.f32 %v1209, %v1331
    %1339 = vrot.lane.b32.xlu0 %v324, 111
    %v1340 = vpop.permute.xlu0 %1339
    %1341 = vrot.lane.b32.xlu0 %v325, 111
    %v1342 = vpop.permute.xlu0 %1341
    %1343 = vrot.lane.b32.xlu0 %v326, 111
    %v1344 = vpop.permute.xlu0 %1343
    %1345 = vrot.lane.b32.xlu0 %v327, 111
    %v1346 = vpop.permute.xlu0 %1345
    %vm1347 = vcmp.lt.s32.totalorder %v223, 111
    %v1348 = vsel %vm1347, %v1344, %v1346
    %v1349 = vsel %vm1347, %v1342, %v1344
    %v1350 = vsel %vm1347, %v1340, %v1342
    %v1351 = vsel %vm1347, %v1346, %v1340
    %s1352 = scalar_lea.vmem [#allocation5], 384
    %v1353 = vld [vmem:[%s1352] sm:$0xff]
    %v1354 = vld [vmem:[%s1352 + $0x8] sm:$0xff]
    %v1355 = vld [vmem:[%s1352 + $0x10] sm:$0xff]
    %v1356 = vld [vmem:[%s1352 + $0x18] sm:$0xff]
    %v1357 = vmul.f32 %v1350, %v1353
    %v1358 = vmul.f32 %v1349, %v1354
    %v1359 = vmul.f32 %v1348, %v1355
    %v1360 = vmul.f32 %v1351, %v1356
    %v1361 = vpack.c.bf16 %v1357, %v1357
    %v1362 = vpack.c.bf16 %v1358, %v1358
    %v1363 = vpack.c.bf16 %v1359, %v1359
    %v1364 = vpack.c.bf16 %v1360, %v1360
    %s1365 = scalar_lea.vmem %s2, 32
    %v1366 = vld [vmem:[%s1365] sm:$0xf]
    %v1368 = vsel %vm383, %v1366, 0
    %v1371 = vsel %vm387, %v1361, 0
    %v1374 = vsel %vm387, %v1362, 0
    %v1377 = vsel %vm387, %v1363, 0
    %v1380 = vsel %vm387, %v1364, 0
    %1382 = vmatprep.subr.bf16.mxu0 %v1374
    %1383 = vmatpush1.bf16.msra.mxu0 %v1371
    %1384 = vmatprep.subr.bf16.mxu0 0
    %1385 = vmatpush1.bf16.msra.mxu0 0
    %1386 = vmatprep.subr.bf16.mxu0 0
    %1387 = vmatpush1.bf16.msra.mxu0 0
    %1388 = vmatprep.subr.bf16.mxu0 0
    %1389 = vmatpush1.bf16.msra.mxu0 0
    %1390 = vmatprep.subr.bf16.mxu0 0
    %1391 = vmatpush1.bf16.msra.mxu0 0
    %1392 = vmatprep.subr.bf16.mxu0 0
    %1393 = vmatpush1.bf16.msra.mxu0 0
    %1394 = vmatprep.subr.bf16.mxu0 0
    %1395 = vmatpush1.bf16.msra.mxu0 0
    %1396 = vmatprep.subr.bf16.mxu0 0
    %1397 = vmatpush1.bf16.msra.mxu0 0
    %1398 = vmatprep.subr.bf16.mxu0 0
    %1399 = vmatpush1.bf16.msra.mxu0 0
    %1400 = vmatprep.subr.bf16.mxu0 0
    %1401 = vmatpush1.bf16.msra.mxu0 0
    %1402 = vmatprep.subr.bf16.mxu0 0
    %1403 = vmatpush1.bf16.msra.mxu0 0
    %1404 = vmatprep.subr.bf16.mxu0 0
    %1405 = vmatpush1.bf16.msra.mxu0 0
    %1406 = vmatprep.subr.bf16.mxu0 0
    %1407 = vmatpush1.bf16.msra.mxu0 0
    %1408 = vmatprep.subr.bf16.mxu0 0
    %1409 = vmatpush1.bf16.msra.mxu0 0
    %1410 = vmatprep.subr.bf16.mxu0 0
    %1411 = vmatpush1.bf16.msra.mxu0 0
    %1412 = vmatprep.subr.bf16.mxu0 0
    %1413 = vmatpush1.bf16.msra.mxu0 0
    %1414 = vmatprep.mubr.bf16.mxu0 0
    %1415 = vmatmul.mubr.bf16.gmra.mrb[0].mxu0 %v1368
    %v1416 = vpop.f32.mrb[0].mxu0
    %v1417 = vadd.f32 0.0, %v1416
    %v1418 = vpop.f32.mrb[0].mxu0
    %v1419 = vadd.f32 0.0, %v1418
    %v1420 = vpop.f32.mrb[0].mxu0
    %v1421 = vpop.f32.mrb[0].mxu0
    %1422 = vdwg.mxu0
    %1423 = vmatprep.subr.bf16.mxu0 %v1380
    %1424 = vmatpush1.bf16.msra.mxu0 %v1377
    %1425 = vmatprep.subr.bf16.mxu0 0
    %1426 = vmatpush1.bf16.msra.mxu0 0
    %1427 = vmatprep.subr.bf16.mxu0 0
    %1428 = vmatpush1.bf16.msra.mxu0 0
    %1429 = vmatprep.subr.bf16.mxu0 0
    %1430 = vmatpush1.bf16.msra.mxu0 0
    %1431 = vmatprep.subr.bf16.mxu0 0
    %1432 = vmatpush1.bf16.msra.mxu0 0
    %1433 = vmatprep.subr.bf16.mxu0 0
    %1434 = vmatpush1.bf16.msra.mxu0 0
    %1435 = vmatprep.subr.bf16.mxu0 0
    %1436 = vmatpush1.bf16.msra.mxu0 0
    %1437 = vmatprep.subr.bf16.mxu0 0
    %1438 = vmatpush1.bf16.msra.mxu0 0
    %1439 = vmatprep.subr.bf16.mxu0 0
    %1440 = vmatpush1.bf16.msra.mxu0 0
    %1441 = vmatprep.subr.bf16.mxu0 0
    %1442 = vmatpush1.bf16.msra.mxu0 0
    %1443 = vmatprep.subr.bf16.mxu0 0
    %1444 = vmatpush1.bf16.msra.mxu0 0
    %1445 = vmatprep.subr.bf16.mxu0 0
    %1446 = vmatpush1.bf16.msra.mxu0 0
    %1447 = vmatprep.subr.bf16.mxu0 0
    %1448 = vmatpush1.bf16.msra.mxu0 0
    %1449 = vmatprep.subr.bf16.mxu0 0
    %1450 = vmatpush1.bf16.msra.mxu0 0
    %1451 = vmatprep.subr.bf16.mxu0 0
    %1452 = vmatpush1.bf16.msra.mxu0 0
    %1453 = vmatprep.subr.bf16.mxu0 0
    %1454 = vmatpush1.bf16.msra.mxu0 0
    %1455 = vmatprep.mubr.bf16.mxu0 0
    %1456 = vmatmul.mubr.bf16.gmra.mrb[0].mxu0 %v1368
    %v1457 = vpop.f32.mrb[0].mxu0
    %v1458 = vadd.f32 0.0, %v1457
    %v1459 = vpop.f32.mrb[0].mxu0
    %v1460 = vadd.f32 0.0, %v1459
    %v1461 = vpop.f32.mrb[0].mxu0
    %v1462 = vpop.f32.mrb[0].mxu0
    %1463 = vdwg.mxu0
    %v1464 = vadd.f32 %v1335, %v1417
    %v1465 = vadd.f32 %v1336, %v1419
    %v1466 = vadd.f32 %v1337, %v1458
    %v1467 = vadd.f32 %v1338, %v1460
    %v1468 = vadd.f32 %v1464, %v1465
    %1469 = vadd.xlane.f32.xlu0 %v1468
    %v1470 = vpop.xlane.xlu0 %1469
    %v1471 = vadd.f32 %v1466, %v1467
    %1472 = vadd.xlane.f32.xlu0 %v1471
    %v1473 = vpop.xlane.xlu0 %1472
    %vm1474 = vcmask 7168
    %v1475 = vsel %vm1474, %v1470, %v1473
    %v1477 = vsel %vm383, %v50, 0
    %1479 = vmatprep.subr.mxu0 0.0
    %1480 = vmatpush1.msra.mxu0 %v1475
    %1481 = vmatprep.subr.mxu0 0.0
    %1482 = vmatpush1.msra.mxu0 0.0
    %1483 = vmatprep.subr.mxu0 0.0
    %1484 = vmatpush1.msra.mxu0 0.0
    %1485 = vmatprep.subr.mxu0 0.0
    %1486 = vmatpush1.msra.mxu0 0.0
    %1487 = vmatprep.subr.mxu0 0.0
    %1488 = vmatpush1.msra.mxu0 0.0
    %1489 = vmatprep.subr.mxu0 0.0
    %1490 = vmatpush1.msra.mxu0 0.0
    %1491 = vmatprep.subr.mxu0 0.0
    %1492 = vmatpush1.msra.mxu0 0.0
    %1493 = vmatprep.subr.mxu0 0.0
    %1494 = vmatpush1.msra.mxu0 0.0
    %1495 = vmatprep.subr.mxu0 0.0
    %1496 = vmatpush1.msra.mxu0 0.0
    %1497 = vmatprep.subr.mxu0 0.0
    %1498 = vmatpush1.msra.mxu0 0.0
    %1499 = vmatprep.subr.mxu0 0.0
    %1500 = vmatpush1.msra.mxu0 0.0
    %1501 = vmatprep.subr.mxu0 0.0
    %1502 = vmatpush1.msra.mxu0 0.0
    %1503 = vmatprep.subr.mxu0 0.0
    %1504 = vmatpush1.msra.mxu0 0.0
    %1505 = vmatprep.subr.mxu0 0.0
    %1506 = vmatpush1.msra.mxu0 0.0
    %1507 = vmatprep.subr.mxu0 0.0
    %1508 = vmatpush1.msra.mxu0 0.0
    %1509 = vmatprep.subr.mxu0 0.0
    %1510 = vmatpush1.msra.mxu0 0.0
    %1511 = vmatprep.subr.mxu0 0.0
    %1512 = vmatpush1.msra.mxu0 0.0
    %1513 = vmatprep.subr.mxu0 0.0
    %1514 = vmatpush1.msra.mxu0 0.0
    %1515 = vmatprep.subr.mxu0 0.0
    %1516 = vmatpush1.msra.mxu0 0.0
    %1517 = vmatprep.subr.mxu0 0.0
    %1518 = vmatpush1.msra.mxu0 0.0
    %1519 = vmatprep.subr.mxu0 0.0
    %1520 = vmatpush1.msra.mxu0 0.0
    %1521 = vmatprep.subr.mxu0 0.0
    %1522 = vmatpush1.msra.mxu0 0.0
    %1523 = vmatprep.subr.mxu0 0.0
    %1524 = vmatpush1.msra.mxu0 0.0
    %1525 = vmatprep.subr.mxu0 0.0
    %1526 = vmatpush1.msra.mxu0 0.0
    %1527 = vmatprep.subr.mxu0 0.0
    %1528 = vmatpush1.msra.mxu0 0.0
    %1529 = vmatprep.subr.mxu0 0.0
    %1530 = vmatpush1.msra.mxu0 0.0
    %1531 = vmatprep.subr.mxu0 0.0
    %1532 = vmatpush1.msra.mxu0 0.0
    %1533 = vmatprep.subr.mxu0 0.0
    %1534 = vmatpush1.msra.mxu0 0.0
    %1535 = vmatprep.subr.mxu0 0.0
    %1536 = vmatpush1.msra.mxu0 0.0
    %1537 = vmatprep.subr.mxu0 0.0
    %1538 = vmatpush1.msra.mxu0 0.0
    %1539 = vmatprep.subr.mxu0 0.0
    %1540 = vmatpush1.msra.mxu0 0.0
    %1541 = vmatprep.subr.mxu0 0.0
    %1542 = vmatpush1.msra.mxu0 0.0
    %1543 = vmatprep.mubr.f32.mxu0 0.0
    %1544 = vmatmul.mubr.f32.gmra.mrb[0].mxu0 %v1477
    %v1545 = vpop.f32.mrb[0].mxu0
    %v1546 = vadd.f32 0.0, %v1545
    %v1547 = vpop.f32.mrb[0].mxu0
    %1548 = vdwg.mxu0
    %1550 = vset.pattern.permute.xlu0 0
    %1551 = vperm.xlu0 %1550, %v1546
    %v1552 = vpop.permute.xlu0 %1551
    %v1554 = vsub.f32 %v1464, %v1552
    %v1555 = vsub.f32 %v1465, %v1552
    %1556 = vset.pattern.permute.xlu0 1
    %1557 = vperm.xlu0 %1556, %v1546
    %v1558 = vpop.permute.xlu0 %1557
    %v1560 = vsub.f32 %v1466, %v1558
    %v1561 = vsub.f32 %v1467, %v1558
    %v1562 = vmul.f32 %v1554, %v1554
    %v1563 = vmul.f32 %v1555, %v1555
    %v1564 = vadd.f32 %v1562, %v1563
    %1565 = vadd.xlane.f32.xlu0 %v1564
    %v1566 = vpop.xlane.xlu0 %1565
    %v1567 = vmul.f32 %v1560, %v1560
    %v1568 = vmul.f32 %v1561, %v1561
    %v1569 = vadd.f32 %v1567, %v1568
    %1570 = vadd.xlane.f32.xlu0 %v1569
    %v1571 = vpop.xlane.xlu0 %1570
    %v1572 = vsel %vm1474, %v1566, %v1571
    %1573 = vmatprep.subr.mxu0 0.0
    %1574 = vmatpush1.msra.mxu0 %v1572
    %1575 = vmatprep.subr.mxu0 0.0
    %1576 = vmatpush1.msra.mxu0 0.0
    %1577 = vmatprep.subr.mxu0 0.0
    %1578 = vmatpush1.msra.mxu0 0.0
    %1579 = vmatprep.subr.mxu0 0.0
    %1580 = vmatpush1.msra.mxu0 0.0
    %1581 = vmatprep.subr.mxu0 0.0
    %1582 = vmatpush1.msra.mxu0 0.0
    %1583 = vmatprep.subr.mxu0 0.0
    %1584 = vmatpush1.msra.mxu0 0.0
    %1585 = vmatprep.subr.mxu0 0.0
    %1586 = vmatpush1.msra.mxu0 0.0
    %1587 = vmatprep.subr.mxu0 0.0
    %1588 = vmatpush1.msra.mxu0 0.0
    %1589 = vmatprep.subr.mxu0 0.0
    %1590 = vmatpush1.msra.mxu0 0.0
    %1591 = vmatprep.subr.mxu0 0.0
    %1592 = vmatpush1.msra.mxu0 0.0
    %1593 = vmatprep.subr.mxu0 0.0
    %1594 = vmatpush1.msra.mxu0 0.0
    %1595 = vmatprep.subr.mxu0 0.0
    %1596 = vmatpush1.msra.mxu0 0.0
    %1597 = vmatprep.subr.mxu0 0.0
    %1598 = vmatpush1.msra.mxu0 0.0
    %1599 = vmatprep.subr.mxu0 0.0
    %1600 = vmatpush1.msra.mxu0 0.0
    %1601 = vmatprep.subr.mxu0 0.0
    %1602 = vmatpush1.msra.mxu0 0.0
    %1603 = vmatprep.subr.mxu0 0.0
    %1604 = vmatpush1.msra.mxu0 0.0
    %1605 = vmatprep.subr.mxu0 0.0
    %1606 = vmatpush1.msra.mxu0 0.0
    %1607 = vmatprep.subr.mxu0 0.0
    %1608 = vmatpush1.msra.mxu0 0.0
    %1609 = vmatprep.subr.mxu0 0.0
    %1610 = vmatpush1.msra.mxu0 0.0
    %1611 = vmatprep.subr.mxu0 0.0
    %1612 = vmatpush1.msra.mxu0 0.0
    %1613 = vmatprep.subr.mxu0 0.0
    %1614 = vmatpush1.msra.mxu0 0.0
    %1615 = vmatprep.subr.mxu0 0.0
    %1616 = vmatpush1.msra.mxu0 0.0
    %1617 = vmatprep.subr.mxu0 0.0
    %1618 = vmatpush1.msra.mxu0 0.0
    %1619 = vmatprep.subr.mxu0 0.0
    %1620 = vmatpush1.msra.mxu0 0.0
    %1621 = vmatprep.subr.mxu0 0.0
    %1622 = vmatpush1.msra.mxu0 0.0
    %1623 = vmatprep.subr.mxu0 0.0
    %1624 = vmatpush1.msra.mxu0 0.0
    %1625 = vmatprep.subr.mxu0 0.0
    %1626 = vmatpush1.msra.mxu0 0.0
    %1627 = vmatprep.subr.mxu0 0.0
    %1628 = vmatpush1.msra.mxu0 0.0
    %1629 = vmatprep.subr.mxu0 0.0
    %1630 = vmatpush1.msra.mxu0 0.0
    %1631 = vmatprep.subr.mxu0 0.0
    %1632 = vmatpush1.msra.mxu0 0.0
    %1633 = vmatprep.subr.mxu0 0.0
    %1634 = vmatpush1.msra.mxu0 0.0
    %1635 = vmatprep.subr.mxu0 0.0
    %1636 = vmatpush1.msra.mxu0 0.0
    %1637 = vmatprep.mubr.f32.mxu0 0.0
    %1638 = vmatmul.mubr.f32.gmra.mrb[0].mxu0 %v1477
    %v1639 = vpop.f32.mrb[0].mxu0
    %v1640 = vadd.f32 1e-05, %v1639
    %v1641 = vpop.f32.mrb[0].mxu0
    %1642 = vdwg.mxu0
    %v1643 = vrsqrt.pop %v1640
    %1645 = vset.pattern.permute.xlu0 0
    %1646 = vperm.xlu0 %1645, %v1643
    %v1647 = vpop.permute.xlu0 %1646
    %v1649 = vmul.f32 %v1554, %v1647
    %v1650 = vmul.f32 %v1555, %v1647
    %1651 = vset.pattern.permute.xlu0 8
    %1652 = vperm.xlu0 %1651, %v50
    %v1653 = vpop.permute.xlu0 %1652
    %v1655 = vmul.f32 %v1649, %v1653
    %v1656 = vmul.f32 %v1650, %v1653
    %1657 = vset.pattern.permute.xlu0 9
    %1658 = vperm.xlu0 %1657, %v50
    %v1659 = vpop.permute.xlu0 %1658
    %v1661 = vadd.f32 %v1655, %v1659
    %v1662 = vadd.f32 %v1656, %v1659
    %v1663 = vmax.f32 %v1661, 0.0
    %v1664 = vmax.f32 %v1662, 0.0
    %1665 = vset.pattern.permute.xlu0 10
    %1666 = vperm.xlu0 %1665, %v50
    %v1667 = vpop.permute.xlu0 %1666
    %v1669 = vmul.f32 %v1663, %v1667
    %v1670 = vmul.f32 %v1664, %v1667
    %v1671 = vrot.slane %v1669, 4
    %v1672 = vadd.f32 %v1669, %v1671
    %v1673 = vrot.slane %v1672, 2
    %v1674 = vadd.f32 %v1672, %v1673
    %v1675 = vrot.slane %v1674, 1
    %v1676 = vadd.f32 %v1674, %v1675
    %v1677 = vrot.slane %v1670, 4
    %v1678 = vadd.f32 %v1670, %v1677
    %v1679 = vrot.slane %v1678, 2
    %v1680 = vadd.f32 %v1678, %v1679
    %v1681 = vrot.slane %v1680, 1
    %v1682 = vadd.f32 %v1680, %v1681
    %1683 = vset.pattern.permute.xlu0 11
    %1684 = vperm.xlu0 %1683, %v50
    %v1685 = vpop.permute.xlu0 %1684
    %v1687 = vadd.f32 %v1676, %v1685
    %v1688 = vadd.f32 %v1682, %v1685
    %v1689 = vxor.u32 %v1687, 2147483648
    %v1690 = vxor.u32 %v1688, 2147483648
    %v1691 = vmul.f32 %v1689, 1.442695
    %v1692 = vpow.pop %v1691
    %v1693 = vmul.f32 %v1690, 1.442695
    %v1694 = vpow.pop %v1693
    %v1695 = vadd.f32 %v1692, 1.0
    %v1696 = vadd.f32 %v1694, 1.0
    %v1697 = vrcp.pop %v1695
    %v1698 = vmul.f32 1.0, %v1697
    %v1699 = vrcp.pop %v1696
    %v1700 = vmul.f32 1.0, %v1699
    %v1701 = vmul.f32 %v1698, %v320
    %v1702 = vmul.f32 %v1700, %v321
    %1703 = vset.pattern.permute.xlu0 1
    %1704 = vperm.xlu0 %1703, %v1643
    %v1705 = vpop.permute.xlu0 %1704
    %v1707 = vmul.f32 %v1560, %v1705
    %v1708 = vmul.f32 %v1561, %v1705
    %v1709 = vmul.f32 %v1707, %v1653
    %v1710 = vmul.f32 %v1708, %v1653
    %v1711 = vadd.f32 %v1709, %v1659
    %v1712 = vadd.f32 %v1710, %v1659
    %v1713 = vmax.f32 %v1711, 0.0
    %v1714 = vmax.f32 %v1712, 0.0
    %v1715 = vmul.f32 %v1713, %v1667
    %v1716 = vmul.f32 %v1714, %v1667
    %v1717 = vrot.slane %v1715, 4
    %v1718 = vadd.f32 %v1715, %v1717
    %v1719 = vrot.slane %v1718, 2
    %v1720 = vadd.f32 %v1718, %v1719
    %v1721 = vrot.slane %v1720, 1
    %v1722 = vadd.f32 %v1720, %v1721
    %v1723 = vrot.slane %v1716, 4
    %v1724 = vadd.f32 %v1716, %v1723
    %v1725 = vrot.slane %v1724, 2
    %v1726 = vadd.f32 %v1724, %v1725
    %v1727 = vrot.slane %v1726, 1
    %v1728 = vadd.f32 %v1726, %v1727
    %v1729 = vadd.f32 %v1722, %v1685
    %v1730 = vadd.f32 %v1728, %v1685
    %v1731 = vxor.u32 %v1729, 2147483648
    %v1732 = vxor.u32 %v1730, 2147483648
    %v1733 = vmul.f32 %v1731, 1.442695
    %v1734 = vpow.pop %v1733
    %v1735 = vmul.f32 %v1732, 1.442695
    %v1736 = vpow.pop %v1735
    %v1737 = vadd.f32 %v1734, 1.0
    %v1738 = vadd.f32 %v1736, 1.0
    %v1739 = vrcp.pop %v1737
    %v1740 = vmul.f32 1.0, %v1739
    %v1741 = vrcp.pop %v1738
    %v1742 = vmul.f32 1.0, %v1741
    %v1743 = vmul.f32 %v1740, %v320
    %v1744 = vmul.f32 %v1742, %v321
    %v1749 = vcombine.low %v1701, %v1702
    %v1750 = vcombine.low %v1743, %v1744
    %v1752 = vunpack.c.l.s4 1966171168
    %v1753 = vunpack.c.0.s8 %v1752
    %v1754 = vlaneseq
    %v1755 = vshrl.u32 %v1754, 7
    %v1756 = vsub.s32 %v1753, %v1755
    %v1757 = vrot.slane %v1749, %v1756
    %v1759 = vunpack.c.l.s4 1966171168
    %v1760 = vunpack.c.0.s8 %v1759
    %v1761 = vlaneseq
    %v1762 = vshrl.u32 %v1761, 7
    %v1763 = vsub.s32 %v1760, %v1762
    %v1764 = vrot.slane %v1750, %v1763
    %v1765 = vcombine.low %v1757, %v1764
    %v1767 = vunpack.c.l.s4 1966171168
    %v1768 = vunpack.c.0.s8 %v1767
    %v1769 = vlaneseq
    %v1770 = vshrl.u32 %v1769, 7
    %v1771 = vsub.s32 %v1768, %v1770
    %v1772 = vrot.slane %v1765, %v1771
    %v1774 = vlaneseq
    %vm1775 = vcmp.ge.s32.totalorder %v1774, 0
    %vm1776 = vcmp.lt.s32.totalorder %v1774, 512
    %vm1777 = vmand %vm1775, %vm1776
    %1778 = vst.msk [vmem:[#allocation7] sm:$0xf] %vm1777, %v1772
    // Predicated region
    $region30: #{tpu_custom_call.1} parent=1 // pred_check
      _
    $region31: #{tpu_custom_call.1} parent=1 // pred_check_branch
      %1780 = sbr.rel (0) target = $region33
    $region32: #{tpu_custom_call.1} parent=1 // pred_region
      %s1782 = ssub.s32 64, 64
      %1783 = vsyncadd [#allocation4], %s1782
      %s1785 = sshll.u32 [#allocation7], 4
      %s1786 = int_to_ptr.vmem [resolvable:$true] %s1785
      %1788 = dma.vmem_to_hbm [thread:$0]  %s1786, 64, %s5, [#allocation4]
    $region33: #{tpu_custom_call.1} parent=1 // pred_fallthru
      _
    // Predicated region
    $region34: #{tpu_custom_call.1} parent=1 // pred_check
      _
    $region35: #{tpu_custom_call.1} parent=1 // pred_check_branch
      %1790 = sbr.rel (0) target = $region37
    $region36: #{tpu_custom_call.1} parent=1 // pred_region
      %1791 = dma.done [#allocation4], 64
    $region37: #{tpu_custom_call.1} parent=1 // pred_fallthru
      _
    %1792 = vsyncpa [#allocation3], 1
    %1793 = vsyncpa [#allocation6], 1
    %1794 = vsyncpa [#allocation4], 1

</llo_original>
